<compile_context>
chip_gen: v7x
topology: tpu7x:2x2x1
jax: 0.10.0
libtpu: 0.0.40
codegen_flags: <defaults>
</compile_context>

<pallas_src>
import functools

import jax
import jax.numpy as jnp
from jax import lax
from jax.experimental import pallas as pl
from jax.experimental.pallas import tpu as pltpu


def _elu(v):
    # ELU(alpha=1): x if x>0 else exp(x)-1  (clamp arg so the false branch never overflows)
    return jnp.where(v > 0, v, jnp.exp(jnp.minimum(v, 0.0)) - 1.0)


# --------------------------------------------------------------------------- #
# Fused kernel: GraphConv stack -> SortAggregation -> CNN head -> MLP
# --------------------------------------------------------------------------- #
def drgnet_kernel(adj_ref, x_ref,
                  w1_ref, b1_ref, w2_ref, b2_ref, w3_ref, b3_ref,
                  wc1a_ref, wc1b_ref, wc1c_ref, bc1_ref,
                  wc2_ref, bc2_ref,
                  wm1_ref, bm1_ref, wm2_ref, bm2_ref,
                  out_ref, *, num_graphs, nodes_per_graph, kernel_size):
    f32 = jnp.float32
    dot = functools.partial(jnp.dot, preferred_element_type=f32)

    n = adj_ref.shape[0]
    k = nodes_per_graph                    # == sortpool_k (each graph has exactly k nodes)
    c1 = wc1a_ref.shape[1]
    c2 = wc2_ref.shape[1]
    hk = k // 2                            # positions after MaxPool1d(2, 2)
    l2 = hk - kernel_size + 1              # positions after conv2

    adj = adj_ref[...]                     # [N, N]   adj[i, j] = w(j -> i)
    x0 = x_ref[...]                        # [N, F_in]

    # ---- GraphConv stack: h = ELU(concat([adj@h, h]) @ [[Wrel^T],[Wroot^T]] + b) -----
    def gconv(h, w_ref, b_ref):
        agg = dot(adj, h)
        return _elu(dot(jnp.concatenate([agg, h], axis=1), w_ref[...]) + b_ref[...])

    h1 = gconv(x0, w1_ref, b1_ref)                     # [N, H]
    h2 = gconv(h1, w2_ref, b2_ref)                     # [N, H]
    h3 = gconv(h2, w3_ref, b3_ref)                     # [N, 1]   (sort-key channel)

    # ---- conv1 projection BEFORE the sort (row permutation commutes with it) ---------
    # y1pre = concat([h1, h2, h3]) @ Wc1 + bc1, without ever building the concat:
    y1pre = (dot(h1, wc1a_ref[...]) + dot(h2, wc1b_ref[...])
             + h3 * wc1c_ref[...] + bc1_ref[...])      # [N, c1]

    # ---- SortAggregation: stable per-graph DESC sort on the last channel -------------
    # rank via broadcasted compares; applied as a one-hot permutation matmul so the
    # sorted tensor stays in VMEM.
    row = lax.broadcasted_iota(jnp.int32, (n, n), 0)   # row index  -> node j
    col = lax.broadcasted_iota(jnp.int32, (n, n), 1)   # lane index -> node i
    ident = jnp.where(row == col, 1.0, 0.0).astype(f32)
    ones_row = jnp.ones((1, n), f32)

    key_col = h3                                       # key_col[j, 0] = key_j
    key_row = dot(ones_row, ident * key_col)           # key_row[0, i] = key_i  (lane layout)

    # same-graph block mask + per-node graph base offset (graphs = contiguous k-blocks)
    lane = lax.broadcasted_iota(jnp.int32, (1, n), 1)
    base = jnp.zeros((1, n), f32)
    blocks = []
    for g in range(num_graphs):
        lo, hi = g * k, (g + 1) * k
        blocks.append(((row >= lo) & (row < hi)) & ((col >= lo) & (col < hi)))
        base = base + jnp.where((lane >= lo) & (lane < hi), float(lo), 0.0)
    same = blocks[0]
    for blk in blocks[1:]:
        same = same | blk

    gt = key_col > key_row                             # key_j > key_i
    eq = key_col == key_row
    before = row < col                                 # j < i  (stable tie-break by index)
    contrib = jnp.where(same & (gt | (eq & before)), 1.0, 0.0)     # [N, N]
    rank = dot(ones_row, contrib)                      # [1, N]  rank of node i in its graph
    dst_row = base + rank                              # [1, N]  global sorted row of node i
    perm = jnp.where(row.astype(f32) == dst_row, 1.0, 0.0)         # perm[r, i] = (dst_i == r)

    # ---- sorted conv1 output -> ELU -> MaxPool1d(2, 2) -------------------------------
    y1 = _elu(dot(perm, y1pre))                                    # [N, c1]
    z = jnp.max(y1.reshape(n // 2, 2, c1), axis=1)                 # [N/2, c1] (k even ->
    #                                                                 pairs never cross graphs)

    # ---- conv2 (kernel_size taps, stride 1) as ONE im2col matmul, batched over graphs
    taps = []
    for t in range(kernel_size):
        gslices = [z[g * hk + t: g * hk + t + l2, :] for g in range(num_graphs)]
        taps.append(gslices[0] if num_graphs == 1 else jnp.concatenate(gslices, axis=0))
    im2col = jnp.concatenate(taps, axis=1)                         # [B*l2, ks*c1]
    y2 = _elu(dot(im2col, wc2_ref[...]) + bc2_ref[...])            # [B*l2, c2]

    # ---- flatten (torch channel-major order folded into the wm1 layout) + MLP --------
    graph_rows = []
    for g in range(num_graphs):
        pieces = [y2[g * l2 + p: g * l2 + p + 1, :] for p in range(l2)]
        graph_rows.append(pieces[0] if l2 == 1 else jnp.concatenate(pieces, axis=1))
    flat = graph_rows[0] if num_graphs == 1 else jnp.concatenate(graph_rows, axis=0)  # [B, l2*c2]
    hid = _elu(dot(flat, wm1_ref[...]) + bm1_ref[...])             # [B, 128]
    # TODO(synk): PyG MLP dropout(0.5) is identity at inference; training-mode stochastic
    # masking is not implemented here.
    out_ref[...] = dot(hid, wm2_ref[...]) + bm2_ref[...]           # [B, 128] zero-padded logits


# --------------------------------------------------------------------------- #
# Wrappers
# --------------------------------------------------------------------------- #
def _full_spec(arr):
    nd = arr.ndim
    return pl.BlockSpec(arr.shape, lambda i, _nd=nd: (0,) * _nd)


def prepare_params(gc_params, w_c1, b_c1, w_c2, b_c2, w_m1, b_m1, w_m2, b_m2,
                   *, conv_hidden, kernel_size, sortpool_k, num_classes, logits_pad):
    """One-time weight re-layout so the jitted forward is a single pallas_call."""
    c1, c2 = conv_hidden
    l2 = sortpool_k // 2 - kernel_size + 1
    prepped = []
    for layer in gc_params:
        # GraphConv(x) = lin_rel(adj @ x) + lin_root(x)  ->  concat([agg, x]) @ W_stack + b
        prepped.append(jnp.concatenate([layer["w_rel"].T, layer["w_root"].T], axis=0))
        prepped.append(layer["b_rel"].reshape(1, -1))

    # conv1 (kernel = stride = D_total) weight, split per GNN layer so the projection
    # can be applied BEFORE the sort permutation (no concat latent in the kernel).
    assert len(gc_params) == 3, "kernel is specialized to num_layers == 2 (2 hidden convs + key conv)"
    hdim = gc_params[0]["w_rel"].shape[0]
    wc1_full = jnp.transpose(w_c1[:, 0, :])                               # [D_total, c1]
    wc1a = wc1_full[:hdim]                                                # [H, c1]  (h1 block)
    wc1b = wc1_full[hdim:2 * hdim]                                        # [H, c1]  (h2 block)
    wc1c = wc1_full[2 * hdim:2 * hdim + 1]                                # [1, c1]  (key block)
    bc1 = b_c1.reshape(1, -1)

    wc2 = jnp.transpose(w_c2, (2, 1, 0)).reshape(kernel_size * c1, c2)    # row idx = t*c1 + c
    bc2 = b_c2.reshape(1, -1)

    hidden = w_m1.shape[0]
    # torch flat index = c*l2 + p; kernel flat index = p*c2 + c  -> permute weight rows once
    wm1 = jnp.transpose(w_m1.reshape(hidden, c2, l2), (2, 1, 0)).reshape(l2 * c2, hidden)
    bm1 = b_m1.reshape(1, -1)
    wm2 = jnp.zeros((hidden, logits_pad), jnp.float32).at[:, :num_classes].set(w_m2.T)
    bm2 = jnp.zeros((1, logits_pad), jnp.float32).at[:, :num_classes].set(b_m2)
    return tuple(prepped) + (wc1a, wc1b, wc1c, bc1, wc2, bc2, wm1, bm1, wm2, bm2)


def make_forward(*, num_graphs, nodes_per_graph, kernel_size, num_classes, logits_pad=128):
    kernel = functools.partial(drgnet_kernel, num_graphs=num_graphs,
                               nodes_per_graph=nodes_per_graph, kernel_size=kernel_size)

    def forward(adj, x, params):
        args = (adj, x) + tuple(params)
        logits_padded = pl.pallas_call(
            kernel,
            out_shape=jax.ShapeDtypeStruct((num_graphs, logits_pad), jnp.float32),
            grid=(1,),
            in_specs=[_full_spec(a) for a in args],
            out_specs=pl.BlockSpec((num_graphs, logits_pad), lambda i: (0, 0)),
            compiler_params=pltpu.CompilerParams(dimension_semantics=("arbitrary",)),
        )(*args)
        return logits_padded[:, :num_classes]

    return jax.jit(forward)


# --------------------------------------------------------------------------- #
# Main
# --------------------------------------------------------------------------- #
if __name__ == "__main__":
    INPUT_FEATURES = 4
    GNN_HIDDEN = 32
    NUM_LAYERS = 2
    SORTPOOL_K = 16
    NUM_CLASSES = 5
    CONV_HIDDEN = (16, 32)
    KERNEL_SIZE = 5
    NODES_PER_GRAPH = 16           # == SORTPOOL_K -> no truncation / zero-padding needed
    NUM_GRAPHS = 2
    N = NODES_PER_GRAPH * NUM_GRAPHS
    TOTAL_LATENT = GNN_HIDDEN * NUM_LAYERS + 1          # 65
    L2 = SORTPOOL_K // 2 - KERNEL_SIZE + 1              # 4
    DENSE_DIM = L2 * CONV_HIDDEN[1]                     # 128
    LOGITS_PAD = 128

    keys = iter(jax.random.split(jax.random.PRNGKey(0), 64))

    def rnd(shape, scale=0.1):
        return (scale * jax.random.normal(next(keys), shape)).astype(jnp.float32)

    # ---- inputs -------------------------------------------------------------
    x = rnd((N, INPUT_FEATURES), 1.0)
    src, dst = [], []
    for g in range(NUM_GRAPHS):                     # bidirectional ring per graph
        for i in range(NODES_PER_GRAPH):
            a = g * NODES_PER_GRAPH + i
            b = g * NODES_PER_GRAPH + (i + 1) % NODES_PER_GRAPH
            src += [a, b]
            dst += [b, a]
    src = jnp.array(src, jnp.int32)
    dst = jnp.array(dst, jnp.int32)
    edge_weight = jax.random.uniform(next(keys), (src.shape[0],),
                                     minval=0.5, maxval=1.5).astype(jnp.float32)
    # `batch` is encoded as contiguous equal-size node blocks per graph.
    # TODO(synk): SortAggregation truncation / zero-padding for graphs with != k nodes
    # is not implemented (each graph is assumed to have exactly sortpool_k nodes).
    # dense adjacency: adj[i, j] = weight of edge j -> i (sum over duplicates)
    adj = jnp.zeros((N, N), jnp.float32).at[dst, src].add(edge_weight)

    # ---- parameters (torch layouts, deterministic synthetic init) -----------
    ins = [INPUT_FEATURES] + [GNN_HIDDEN] * NUM_LAYERS        # [4, 32, 32]
    outs = [GNN_HIDDEN] * NUM_LAYERS + [1]                    # [32, 32, 1]
    gc_params = [dict(w_rel=rnd((co, ci)), b_rel=rnd((co,)), w_root=rnd((co, ci)))
                 for ci, co in zip(ins, outs)]

    w_c1 = rnd((CONV_HIDDEN[0], 1, TOTAL_LATENT))
    b_c1 = rnd((CONV_HIDDEN[0],))
    w_c2 = rnd((CONV_HIDDEN[1], CONV_HIDDEN[0], KERNEL_SIZE))
    b_c2 = rnd((CONV_HIDDEN[1],))
    w_m1 = rnd((128, DENSE_DIM))
    b_m1 = rnd((128,))
    w_m2 = rnd((NUM_CLASSES, 128))
    b_m2 = rnd((NUM_CLASSES,))

    # ---- one-time param prep + jitted fused forward -------------------------
    params = prepare_params(gc_params, w_c1, b_c1, w_c2, b_c2, w_m1, b_m1, w_m2, b_m2,
                            conv_hidden=CONV_HIDDEN, kernel_size=KERNEL_SIZE,
                            sortpool_k=SORTPOOL_K, num_classes=NUM_CLASSES,
                            logits_pad=LOGITS_PAD)
    forward = make_forward(num_graphs=NUM_GRAPHS, nodes_per_graph=NODES_PER_GRAPH,
                           kernel_size=KERNEL_SIZE, num_classes=NUM_CLASSES,
                           logits_pad=LOGITS_PAD)
    logits = jax.block_until_ready(forward(adj, x, params))

    # ---- pure-JAX reference (same math, highest precision) ------------------
    def reference():
        def elu(v):
            return jnp.where(v > 0, v, jnp.exp(jnp.minimum(v, 0.0)) - 1.0)
        with jax.default_matmul_precision("highest"):
            h = x
            feats = []
            for layer in gc_params:
                agg = adj @ h
                h = elu(agg @ layer["w_rel"].T + layer["b_rel"] + h @ layer["w_root"].T)
                feats.append(h)
            xc = jnp.concatenate(feats, axis=1)
            xbr = xc.reshape(NUM_GRAPHS, NODES_PER_GRAPH, TOTAL_LATENT)
            o = jnp.argsort(-xbr[:, :, -1], axis=1)
            pr = jnp.take_along_axis(xbr, o[:, :, None], axis=1)
            y1 = elu(jnp.einsum("bkd,cd->bkc", pr, w_c1[:, 0, :]) + b_c1)
            z = jnp.max(y1.reshape(NUM_GRAPHS, SORTPOOL_K // 2, 2, CONV_HIDDEN[0]), axis=2)
            y2 = jnp.zeros((NUM_GRAPHS, L2, CONV_HIDDEN[1]), jnp.float32)
            for t in range(KERNEL_SIZE):
                y2 = y2 + jnp.einsum("blc,oc->blo", z[:, t:t + L2, :], w_c2[:, :, t])
            y2 = elu(y2 + b_c2)
            flat = jnp.transpose(y2, (0, 2, 1)).reshape(NUM_GRAPHS, -1)
            hm = elu(flat @ w_m1.T + b_m1)
            return hm @ w_m2.T + b_m2

    ref = jax.block_until_ready(reference())
    assert logits.shape == (NUM_GRAPHS, NUM_CLASSES)
    assert jnp.allclose(logits, ref, atol=2e-3, rtol=2e-3), (logits, ref)
    print("KERNEL_OK")
</pallas_src>

<mosaic_0001>
module attributes {stable_mosaic.version = 11 : i64} {
  func.func @drgnet_kernel(%arg0: i32, %arg1: memref<32x32xf32, #tpu.memory_space<vmem>>, %arg2: memref<32x4xf32, #tpu.memory_space<vmem>>, %arg3: memref<8x32xf32, #tpu.memory_space<vmem>>, %arg4: memref<1x32xf32, #tpu.memory_space<vmem>>, %arg5: memref<64x32xf32, #tpu.memory_space<vmem>>, %arg6: memref<1x32xf32, #tpu.memory_space<vmem>>, %arg7: memref<64x1xf32, #tpu.memory_space<vmem>>, %arg8: memref<1x1xf32, #tpu.memory_space<vmem>>, %arg9: memref<32x16xf32, #tpu.memory_space<vmem>>, %arg10: memref<32x16xf32, #tpu.memory_space<vmem>>, %arg11: memref<1x16xf32, #tpu.memory_space<vmem>>, %arg12: memref<1x16xf32, #tpu.memory_space<vmem>>, %arg13: memref<80x32xf32, #tpu.memory_space<vmem>>, %arg14: memref<1x32xf32, #tpu.memory_space<vmem>>, %arg15: memref<128x128xf32, #tpu.memory_space<vmem>>, %arg16: memref<1x128xf32, #tpu.memory_space<vmem>>, %arg17: memref<128x128xf32, #tpu.memory_space<vmem>>, %arg18: memref<1x128xf32, #tpu.memory_space<vmem>>, %arg19: memref<2x128xf32, #tpu.memory_space<vmem>>) attributes {dimension_semantics = [#tpu.dimension_semantics<arbitrary>], iteration_bounds = array<i64: 1>, scalar_prefetch = 0 : i64, scratch_operands = 0 : i64, tpu.core_type = #tpu.core_type<tc>, window_params = [{pipeline_mode = #tpu.pipeline_mode<synchronous>, transform_indices = @transform_0, window_bounds = array<i64: 32, 32>}, {pipeline_mode = #tpu.pipeline_mode<synchronous>, transform_indices = @transform_1, window_bounds = array<i64: 32, 4>}, {pipeline_mode = #tpu.pipeline_mode<synchronous>, transform_indices = @transform_2, window_bounds = array<i64: 8, 32>}, {pipeline_mode = #tpu.pipeline_mode<synchronous>, transform_indices = @transform_3, window_bounds = array<i64: 1, 32>}, {pipeline_mode = #tpu.pipeline_mode<synchronous>, transform_indices = @transform_4, window_bounds = array<i64: 64, 32>}, {pipeline_mode = #tpu.pipeline_mode<synchronous>, transform_indices = @transform_5, window_bounds = array<i64: 1, 32>}, {pipeline_mode = #tpu.pipeline_mode<synchronous>, transform_indices = @transform_6, window_bounds = array<i64: 64, 1>}, {pipeline_mode = #tpu.pipeline_mode<synchronous>, transform_indices = @transform_7, window_bounds = array<i64: 1, 1>}, {pipeline_mode = #tpu.pipeline_mode<synchronous>, transform_indices = @transform_8, window_bounds = array<i64: 32, 16>}, {pipeline_mode = #tpu.pipeline_mode<synchronous>, transform_indices = @transform_9, window_bounds = array<i64: 32, 16>}, {pipeline_mode = #tpu.pipeline_mode<synchronous>, transform_indices = @transform_10, window_bounds = array<i64: 1, 16>}, {pipeline_mode = #tpu.pipeline_mode<synchronous>, transform_indices = @transform_11, window_bounds = array<i64: 1, 16>}, {pipeline_mode = #tpu.pipeline_mode<synchronous>, transform_indices = @transform_12, window_bounds = array<i64: 80, 32>}, {pipeline_mode = #tpu.pipeline_mode<synchronous>, transform_indices = @transform_13, window_bounds = array<i64: 1, 32>}, {pipeline_mode = #tpu.pipeline_mode<synchronous>, transform_indices = @transform_14, window_bounds = array<i64: 128, 128>}, {pipeline_mode = #tpu.pipeline_mode<synchronous>, transform_indices = @transform_15, window_bounds = array<i64: 1, 128>}, {pipeline_mode = #tpu.pipeline_mode<synchronous>, transform_indices = @transform_16, window_bounds = array<i64: 128, 128>}, {pipeline_mode = #tpu.pipeline_mode<synchronous>, transform_indices = @transform_17, window_bounds = array<i64: 1, 128>}, {pipeline_mode = #tpu.pipeline_mode<synchronous>, transform_indices = @transform_18, window_bounds = array<i64: 2, 128>}]} {
    %c0 = arith.constant 0 : index
    %c0_0 = arith.constant 0 : index
    %0 = vector.load %arg1[%c0, %c0_0] : memref<32x32xf32, #tpu.memory_space<vmem>>, vector<32x32xf32>
    %c0_1 = arith.constant 0 : index
    %c0_2 = arith.constant 0 : index
    %1 = vector.load %arg2[%c0_1, %c0_2] : memref<32x4xf32, #tpu.memory_space<vmem>>, vector<32x4xf32>
    %cst = arith.constant dense<0.000000e+00> : vector<32x4xf32>
    %2 = tpu.matmul %0, %1, %cst {dimension_numbers = #tpu.dot_dimension_numbers<[1], [0], [0], [1], [0, 0, 1, 1], [], []>} : vector<32x32xf32>, vector<32x4xf32>, vector<32x4xf32> -> vector<32x4xf32>
    %3 = tpu.concatenate %2, %1 in 1 : vector<32x4xf32>, vector<32x4xf32> -> vector<32x8xf32>
    %c0_3 = arith.constant 0 : index
    %c0_4 = arith.constant 0 : index
    %4 = vector.load %arg3[%c0_3, %c0_4] : memref<8x32xf32, #tpu.memory_space<vmem>>, vector<8x32xf32>
    %cst_5 = arith.constant dense<0.000000e+00> : vector<32x32xf32>
    %5 = tpu.matmul %3, %4, %cst_5 {dimension_numbers = #tpu.dot_dimension_numbers<[1], [0], [0], [1], [0, 0, 1, 1], [], []>} : vector<32x8xf32>, vector<8x32xf32>, vector<32x32xf32> -> vector<32x32xf32>
    %c0_6 = arith.constant 0 : index
    %c0_7 = arith.constant 0 : index
    %6 = vector.load %arg4[%c0_6, %c0_7] : memref<1x32xf32, #tpu.memory_space<vmem>>, vector<1x32xf32>
    %7 = vector.broadcast %6 : vector<1x32xf32> to vector<32x32xf32>
    %8 = arith.addf %5, %7 : vector<32x32xf32>
    %cst_8 = arith.constant 0.000000e+00 : f32
    %9 = vector.broadcast %cst_8 : f32 to vector<32x32xf32>
    %10 = arith.cmpf ogt, %8, %9 : vector<32x32xf32>
    %cst_9 = arith.constant 0.000000e+00 : f32
    %11 = vector.broadcast %cst_9 : f32 to vector<32x32xf32>
    %12 = arith.minimumf %8, %11 : vector<32x32xf32>
    %13 = math.exp %12 : vector<32x32xf32>
    %cst_10 = arith.constant 1.000000e+00 : f32
    %14 = vector.broadcast %cst_10 : f32 to vector<32x32xf32>
    %15 = arith.subf %13, %14 : vector<32x32xf32>
    %16 = arith.select %10, %8, %15 : vector<32x32xi1>, vector<32x32xf32>
    %cst_11 = arith.constant dense<0.000000e+00> : vector<32x32xf32>
    %17 = tpu.matmul %0, %16, %cst_11 {dimension_numbers = #tpu.dot_dimension_numbers<[1], [0], [0], [1], [0, 0, 1, 1], [], []>} : vector<32x32xf32>, vector<32x32xf32>, vector<32x32xf32> -> vector<32x32xf32>
    %18 = tpu.concatenate %17, %16 in 1 : vector<32x32xf32>, vector<32x32xf32> -> vector<32x64xf32>
    %c0_12 = arith.constant 0 : index
    %c0_13 = arith.constant 0 : index
    %19 = vector.load %arg5[%c0_12, %c0_13] : memref<64x32xf32, #tpu.memory_space<vmem>>, vector<64x32xf32>
    %cst_14 = arith.constant dense<0.000000e+00> : vector<32x32xf32>
    %20 = tpu.matmul %18, %19, %cst_14 {dimension_numbers = #tpu.dot_dimension_numbers<[1], [0], [0], [1], [0, 0, 1, 1], [], []>} : vector<32x64xf32>, vector<64x32xf32>, vector<32x32xf32> -> vector<32x32xf32>
    %c0_15 = arith.constant 0 : index
    %c0_16 = arith.constant 0 : index
    %21 = vector.load %arg6[%c0_15, %c0_16] : memref<1x32xf32, #tpu.memory_space<vmem>>, vector<1x32xf32>
    %22 = vector.broadcast %21 : vector<1x32xf32> to vector<32x32xf32>
    %23 = arith.addf %20, %22 : vector<32x32xf32>
    %cst_17 = arith.constant 0.000000e+00 : f32
    %24 = vector.broadcast %cst_17 : f32 to vector<32x32xf32>
    %25 = arith.cmpf ogt, %23, %24 : vector<32x32xf32>
    %cst_18 = arith.constant 0.000000e+00 : f32
    %26 = vector.broadcast %cst_18 : f32 to vector<32x32xf32>
    %27 = arith.minimumf %23, %26 : vector<32x32xf32>
    %28 = math.exp %27 : vector<32x32xf32>
    %cst_19 = arith.constant 1.000000e+00 : f32
    %29 = vector.broadcast %cst_19 : f32 to vector<32x32xf32>
    %30 = arith.subf %28, %29 : vector<32x32xf32>
    %31 = arith.select %25, %23, %30 : vector<32x32xi1>, vector<32x32xf32>
    %cst_20 = arith.constant dense<0.000000e+00> : vector<32x32xf32>
    %32 = tpu.matmul %0, %31, %cst_20 {dimension_numbers = #tpu.dot_dimension_numbers<[1], [0], [0], [1], [0, 0, 1, 1], [], []>} : vector<32x32xf32>, vector<32x32xf32>, vector<32x32xf32> -> vector<32x32xf32>
    %33 = tpu.concatenate %32, %31 in 1 : vector<32x32xf32>, vector<32x32xf32> -> vector<32x64xf32>
    %c0_21 = arith.constant 0 : index
    %c0_22 = arith.constant 0 : index
    %34 = vector.load %arg7[%c0_21, %c0_22] : memref<64x1xf32, #tpu.memory_space<vmem>>, vector<64x1xf32>
    %cst_23 = arith.constant dense<0.000000e+00> : vector<32x1xf32>
    %35 = tpu.matmul %33, %34, %cst_23 {dimension_numbers = #tpu.dot_dimension_numbers<[1], [0], [0], [1], [0, 0, 1, 1], [], []>} : vector<32x64xf32>, vector<64x1xf32>, vector<32x1xf32> -> vector<32x1xf32>
    %c0_24 = arith.constant 0 : index
    %c0_25 = arith.constant 0 : index
    %36 = vector.load %arg8[%c0_24, %c0_25] : memref<1x1xf32, #tpu.memory_space<vmem>>, vector<1x1xf32>
    %37 = vector.broadcast %36 : vector<1x1xf32> to vector<32x1xf32>
    %38 = arith.addf %35, %37 : vector<32x1xf32>
    %cst_26 = arith.constant 0.000000e+00 : f32
    %39 = vector.broadcast %cst_26 : f32 to vector<32x1xf32>
    %40 = arith.cmpf ogt, %38, %39 : vector<32x1xf32>
    %cst_27 = arith.constant 0.000000e+00 : f32
    %41 = vector.broadcast %cst_27 : f32 to vector<32x1xf32>
    %42 = arith.minimumf %38, %41 : vector<32x1xf32>
    %43 = math.exp %42 : vector<32x1xf32>
    %cst_28 = arith.constant 1.000000e+00 : f32
    %44 = vector.broadcast %cst_28 : f32 to vector<32x1xf32>
    %45 = arith.subf %43, %44 : vector<32x1xf32>
    %46 = arith.select %40, %38, %45 : vector<32x1xi1>, vector<32x1xf32>
    %c0_29 = arith.constant 0 : index
    %c0_30 = arith.constant 0 : index
    %47 = vector.load %arg9[%c0_29, %c0_30] : memref<32x16xf32, #tpu.memory_space<vmem>>, vector<32x16xf32>
    %cst_31 = arith.constant dense<0.000000e+00> : vector<32x16xf32>
    %48 = tpu.matmul %16, %47, %cst_31 {dimension_numbers = #tpu.dot_dimension_numbers<[1], [0], [0], [1], [0, 0, 1, 1], [], []>} : vector<32x32xf32>, vector<32x16xf32>, vector<32x16xf32> -> vector<32x16xf32>
    %c0_32 = arith.constant 0 : index
    %c0_33 = arith.constant 0 : index
    %49 = vector.load %arg10[%c0_32, %c0_33] : memref<32x16xf32, #tpu.memory_space<vmem>>, vector<32x16xf32>
    %cst_34 = arith.constant dense<0.000000e+00> : vector<32x16xf32>
    %50 = tpu.matmul %31, %49, %cst_34 {dimension_numbers = #tpu.dot_dimension_numbers<[1], [0], [0], [1], [0, 0, 1, 1], [], []>} : vector<32x32xf32>, vector<32x16xf32>, vector<32x16xf32> -> vector<32x16xf32>
    %51 = arith.addf %48, %50 : vector<32x16xf32>
    %c0_35 = arith.constant 0 : index
    %c0_36 = arith.constant 0 : index
    %52 = vector.load %arg11[%c0_35, %c0_36] : memref<1x16xf32, #tpu.memory_space<vmem>>, vector<1x16xf32>
    %53 = vector.broadcast %46 : vector<32x1xf32> to vector<32x16xf32>
    %54 = vector.broadcast %52 : vector<1x16xf32> to vector<32x16xf32>
    %55 = arith.mulf %53, %54 : vector<32x16xf32>
    %56 = arith.addf %51, %55 : vector<32x16xf32>
    %c0_37 = arith.constant 0 : index
    %c0_38 = arith.constant 0 : index
    %57 = vector.load %arg12[%c0_37, %c0_38] : memref<1x16xf32, #tpu.memory_space<vmem>>, vector<1x16xf32>
    %58 = vector.broadcast %57 : vector<1x16xf32> to vector<32x16xf32>
    %59 = arith.addf %56, %58 : vector<32x16xf32>
    %60 = tpu.iota {dimensions = array<i32: 0>} : vector<32x32xi32>
    %61 = tpu.iota {dimensions = array<i32: 1>} : vector<32x32xi32>
    %62 = arith.cmpi eq, %60, %61 : vector<32x32xi32>
    %cst_39 = arith.constant 1.000000e+00 : f32
    %cst_40 = arith.constant 0.000000e+00 : f32
    %63 = vector.broadcast %cst_39 : f32 to vector<32x32xf32>
    %64 = vector.broadcast %cst_40 : f32 to vector<32x32xf32>
    %65 = arith.select %62, %63, %64 : vector<32x32xi1>, vector<32x32xf32>
    %cst_41 = arith.constant 1.000000e+00 : f32
    %66 = vector.broadcast %cst_41 : f32 to vector<1x32xf32>
    %67 = vector.broadcast %46 : vector<32x1xf32> to vector<32x32xf32>
    %68 = arith.mulf %65, %67 : vector<32x32xf32>
    %cst_42 = arith.constant dense<0.000000e+00> : vector<1x32xf32>
    %69 = tpu.matmul %66, %68, %cst_42 {dimension_numbers = #tpu.dot_dimension_numbers<[1], [0], [0], [1], [0, 0, 1, 1], [], []>} : vector<1x32xf32>, vector<32x32xf32>, vector<1x32xf32> -> vector<1x32xf32>
    %70 = tpu.iota {dimensions = array<i32: 1>} : vector<1x32xi32>
    %cst_43 = arith.constant 0.000000e+00 : f32
    %71 = vector.broadcast %cst_43 : f32 to vector<1x32xf32>
    %c0_i32 = arith.constant 0 : i32
    %72 = vector.broadcast %c0_i32 : i32 to vector<32x32xi32>
    %73 = arith.cmpi sge, %60, %72 : vector<32x32xi32>
    %c16_i32 = arith.constant 16 : i32
    %74 = vector.broadcast %c16_i32 : i32 to vector<32x32xi32>
    %75 = arith.cmpi slt, %60, %74 : vector<32x32xi32>
    %76 = arith.andi %73, %75 : vector<32x32xi1>
    %c0_i32_44 = arith.constant 0 : i32
    %77 = vector.broadcast %c0_i32_44 : i32 to vector<32x32xi32>
    %78 = arith.cmpi sge, %61, %77 : vector<32x32xi32>
    %c16_i32_45 = arith.constant 16 : i32
    %79 = vector.broadcast %c16_i32_45 : i32 to vector<32x32xi32>
    %80 = arith.cmpi slt, %61, %79 : vector<32x32xi32>
    %81 = arith.andi %78, %80 : vector<32x32xi1>
    %82 = arith.andi %76, %81 : vector<32x32xi1>
    %c0_i32_46 = arith.constant 0 : i32
    %83 = vector.broadcast %c0_i32_46 : i32 to vector<1x32xi32>
    %84 = arith.cmpi sge, %70, %83 : vector<1x32xi32>
    %c16_i32_47 = arith.constant 16 : i32
    %85 = vector.broadcast %c16_i32_47 : i32 to vector<1x32xi32>
    %86 = arith.cmpi slt, %70, %85 : vector<1x32xi32>
    %87 = arith.andi %84, %86 : vector<1x32xi1>
    %cst_48 = arith.constant 0.000000e+00 : f32
    %cst_49 = arith.constant 0.000000e+00 : f32
    %88 = vector.broadcast %cst_48 : f32 to vector<1x32xf32>
    %89 = vector.broadcast %cst_49 : f32 to vector<1x32xf32>
    %90 = arith.select %87, %88, %89 : vector<1x32xi1>, vector<1x32xf32>
    %91 = arith.addf %71, %90 : vector<1x32xf32>
    %c16_i32_50 = arith.constant 16 : i32
    %92 = vector.broadcast %c16_i32_50 : i32 to vector<32x32xi32>
    %93 = arith.cmpi sge, %60, %92 : vector<32x32xi32>
    %c32_i32 = arith.constant 32 : i32
    %94 = vector.broadcast %c32_i32 : i32 to vector<32x32xi32>
    %95 = arith.cmpi slt, %60, %94 : vector<32x32xi32>
    %96 = arith.andi %93, %95 : vector<32x32xi1>
    %c16_i32_51 = arith.constant 16 : i32
    %97 = vector.broadcast %c16_i32_51 : i32 to vector<32x32xi32>
    %98 = arith.cmpi sge, %61, %97 : vector<32x32xi32>
    %c32_i32_52 = arith.constant 32 : i32
    %99 = vector.broadcast %c32_i32_52 : i32 to vector<32x32xi32>
    %100 = arith.cmpi slt, %61, %99 : vector<32x32xi32>
    %101 = arith.andi %98, %100 : vector<32x32xi1>
    %102 = arith.andi %96, %101 : vector<32x32xi1>
    %c16_i32_53 = arith.constant 16 : i32
    %103 = vector.broadcast %c16_i32_53 : i32 to vector<1x32xi32>
    %104 = arith.cmpi sge, %70, %103 : vector<1x32xi32>
    %c32_i32_54 = arith.constant 32 : i32
    %105 = vector.broadcast %c32_i32_54 : i32 to vector<1x32xi32>
    %106 = arith.cmpi slt, %70, %105 : vector<1x32xi32>
    %107 = arith.andi %104, %106 : vector<1x32xi1>
    %cst_55 = arith.constant 1.600000e+01 : f32
    %cst_56 = arith.constant 0.000000e+00 : f32
    %108 = vector.broadcast %cst_55 : f32 to vector<1x32xf32>
    %109 = vector.broadcast %cst_56 : f32 to vector<1x32xf32>
    %110 = arith.select %107, %108, %109 : vector<1x32xi1>, vector<1x32xf32>
    %111 = arith.addf %91, %110 : vector<1x32xf32>
    %112 = arith.ori %82, %102 : vector<32x32xi1>
    %113 = vector.broadcast %46 : vector<32x1xf32> to vector<32x32xf32>
    %114 = vector.broadcast %69 : vector<1x32xf32> to vector<32x32xf32>
    %115 = arith.cmpf ogt, %113, %114 : vector<32x32xf32>
    %116 = vector.broadcast %46 : vector<32x1xf32> to vector<32x32xf32>
    %117 = vector.broadcast %69 : vector<1x32xf32> to vector<32x32xf32>
    %118 = arith.cmpf oeq, %116, %117 : vector<32x32xf32>
    %119 = arith.cmpi slt, %60, %61 : vector<32x32xi32>
    %120 = arith.andi %118, %119 : vector<32x32xi1>
    %121 = arith.ori %115, %120 : vector<32x32xi1>
    %122 = arith.andi %112, %121 : vector<32x32xi1>
    %cst_57 = arith.constant 1.000000e+00 : f32
    %cst_58 = arith.constant 0.000000e+00 : f32
    %123 = vector.broadcast %cst_57 : f32 to vector<32x32xf32>
    %124 = vector.broadcast %cst_58 : f32 to vector<32x32xf32>
    %125 = arith.select %122, %123, %124 : vector<32x32xi1>, vector<32x32xf32>
    %cst_59 = arith.constant dense<0.000000e+00> : vector<1x32xf32>
    %126 = tpu.matmul %66, %125, %cst_59 {dimension_numbers = #tpu.dot_dimension_numbers<[1], [0], [0], [1], [0, 0, 1, 1], [], []>} : vector<1x32xf32>, vector<32x32xf32>, vector<1x32xf32> -> vector<1x32xf32>
    %127 = arith.addf %111, %126 : vector<1x32xf32>
    %128 = arith.sitofp %60 : vector<32x32xi32> to vector<32x32xf32>
    %129 = vector.broadcast %127 : vector<1x32xf32> to vector<32x32xf32>
    %130 = arith.cmpf oeq, %128, %129 : vector<32x32xf32>
    %cst_60 = arith.constant 1.000000e+00 : f32
    %cst_61 = arith.constant 0.000000e+00 : f32
    %131 = vector.broadcast %cst_60 : f32 to vector<32x32xf32>
    %132 = vector.broadcast %cst_61 : f32 to vector<32x32xf32>
    %133 = arith.select %130, %131, %132 : vector<32x32xi1>, vector<32x32xf32>
    %cst_62 = arith.constant dense<0.000000e+00> : vector<32x16xf32>
    %134 = tpu.matmul %133, %59, %cst_62 {dimension_numbers = #tpu.dot_dimension_numbers<[1], [0], [0], [1], [0, 0, 1, 1], [], []>} : vector<32x32xf32>, vector<32x16xf32>, vector<32x16xf32> -> vector<32x16xf32>
    %cst_63 = arith.constant 0.000000e+00 : f32
    %135 = vector.broadcast %cst_63 : f32 to vector<32x16xf32>
    %136 = arith.cmpf ogt, %134, %135 : vector<32x16xf32>
    %cst_64 = arith.constant 0.000000e+00 : f32
    %137 = vector.broadcast %cst_64 : f32 to vector<32x16xf32>
    %138 = arith.minimumf %134, %137 : vector<32x16xf32>
    %139 = math.exp %138 : vector<32x16xf32>
    %cst_65 = arith.constant 1.000000e+00 : f32
    %140 = vector.broadcast %cst_65 : f32 to vector<32x16xf32>
    %141 = arith.subf %139, %140 : vector<32x16xf32>
    %142 = arith.select %136, %134, %141 : vector<32x16xi1>, vector<32x16xf32>
    %143 = vector.shape_cast %142 : vector<32x16xf32> to vector<16x2x16xf32>
    %cst_66 = arith.constant dense<0xFF800000> : vector<16x16xf32>
    %144 = vector.multi_reduction <maximumf>, %143, %cst_66 [1] : vector<16x2x16xf32> to vector<16x16xf32>
    %145 = vector.extract_strided_slice %144 {offsets = [0, 0], sizes = [4, 16], strides = [1, 1]} : vector<16x16xf32> to vector<4x16xf32>
    %146 = vector.extract_strided_slice %144 {offsets = [8, 0], sizes = [4, 16], strides = [1, 1]} : vector<16x16xf32> to vector<4x16xf32>
    %147 = tpu.concatenate %145, %146 in 0 : vector<4x16xf32>, vector<4x16xf32> -> vector<8x16xf32>
    %148 = vector.extract_strided_slice %144 {offsets = [1, 0], sizes = [4, 16], strides = [1, 1]} : vector<16x16xf32> to vector<4x16xf32>
    %149 = vector.extract_strided_slice %144 {offsets = [9, 0], sizes = [4, 16], strides = [1, 1]} : vector<16x16xf32> to vector<4x16xf32>
    %150 = tpu.concatenate %148, %149 in 0 : vector<4x16xf32>, vector<4x16xf32> -> vector<8x16xf32>
    %151 = vector.extract_strided_slice %144 {offsets = [2, 0], sizes = [4, 16], strides = [1, 1]} : vector<16x16xf32> to vector<4x16xf32>
    %152 = vector.extract_strided_slice %144 {offsets = [10, 0], sizes = [4, 16], strides = [1, 1]} : vector<16x16xf32> to vector<4x16xf32>
    %153 = tpu.concatenate %151, %152 in 0 : vector<4x16xf32>, vector<4x16xf32> -> vector<8x16xf32>
    %154 = vector.extract_strided_slice %144 {offsets = [3, 0], sizes = [4, 16], strides = [1, 1]} : vector<16x16xf32> to vector<4x16xf32>
    %155 = vector.extract_strided_slice %144 {offsets = [11, 0], sizes = [4, 16], strides = [1, 1]} : vector<16x16xf32> to vector<4x16xf32>
    %156 = tpu.concatenate %154, %155 in 0 : vector<4x16xf32>, vector<4x16xf32> -> vector<8x16xf32>
    %157 = vector.extract_strided_slice %144 {offsets = [4, 0], sizes = [4, 16], strides = [1, 1]} : vector<16x16xf32> to vector<4x16xf32>
    %158 = vector.extract_strided_slice %144 {offsets = [12, 0], sizes = [4, 16], strides = [1, 1]} : vector<16x16xf32> to vector<4x16xf32>
    %159 = tpu.concatenate %157, %158 in 0 : vector<4x16xf32>, vector<4x16xf32> -> vector<8x16xf32>
    %160 = tpu.concatenate %147, %150, %153, %156, %159 in 1 : vector<8x16xf32>, vector<8x16xf32>, vector<8x16xf32>, vector<8x16xf32>, vector<8x16xf32> -> vector<8x80xf32>
    %c0_67 = arith.constant 0 : index
    %c0_68 = arith.constant 0 : index
    %161 = vector.load %arg13[%c0_67, %c0_68] : memref<80x32xf32, #tpu.memory_space<vmem>>, vector<80x32xf32>
    %cst_69 = arith.constant dense<0.000000e+00> : vector<8x32xf32>
    %162 = tpu.matmul %160, %161, %cst_69 {dimension_numbers = #tpu.dot_dimension_numbers<[1], [0], [0], [1], [0, 0, 1, 1], [], []>} : vector<8x80xf32>, vector<80x32xf32>, vector<8x32xf32> -> vector<8x32xf32>
    %c0_70 = arith.constant 0 : index
    %c0_71 = arith.constant 0 : index
    %163 = vector.load %arg14[%c0_70, %c0_71] : memref<1x32xf32, #tpu.memory_space<vmem>>, vector<1x32xf32>
    %164 = vector.broadcast %163 : vector<1x32xf32> to vector<8x32xf32>
    %165 = arith.addf %162, %164 : vector<8x32xf32>
    %cst_72 = arith.constant 0.000000e+00 : f32
    %166 = vector.broadcast %cst_72 : f32 to vector<8x32xf32>
    %167 = arith.cmpf ogt, %165, %166 : vector<8x32xf32>
    %cst_73 = arith.constant 0.000000e+00 : f32
    %168 = vector.broadcast %cst_73 : f32 to vector<8x32xf32>
    %169 = arith.minimumf %165, %168 : vector<8x32xf32>
    %170 = math.exp %169 : vector<8x32xf32>
    %cst_74 = arith.constant 1.000000e+00 : f32
    %171 = vector.broadcast %cst_74 : f32 to vector<8x32xf32>
    %172 = arith.subf %170, %171 : vector<8x32xf32>
    %173 = arith.select %167, %165, %172 : vector<8x32xi1>, vector<8x32xf32>
    %174 = vector.extract_strided_slice %173 {offsets = [0, 0], sizes = [1, 32], strides = [1, 1]} : vector<8x32xf32> to vector<1x32xf32>
    %175 = vector.extract_strided_slice %173 {offsets = [1, 0], sizes = [1, 32], strides = [1, 1]} : vector<8x32xf32> to vector<1x32xf32>
    %176 = vector.extract_strided_slice %173 {offsets = [2, 0], sizes = [1, 32], strides = [1, 1]} : vector<8x32xf32> to vector<1x32xf32>
    %177 = vector.extract_strided_slice %173 {offsets = [3, 0], sizes = [1, 32], strides = [1, 1]} : vector<8x32xf32> to vector<1x32xf32>
    %178 = tpu.concatenate %174, %175, %176, %177 in 1 : vector<1x32xf32>, vector<1x32xf32>, vector<1x32xf32>, vector<1x32xf32> -> vector<1x128xf32>
    %179 = vector.extract_strided_slice %173 {offsets = [4, 0], sizes = [1, 32], strides = [1, 1]} : vector<8x32xf32> to vector<1x32xf32>
    %180 = vector.extract_strided_slice %173 {offsets = [5, 0], sizes = [1, 32], strides = [1, 1]} : vector<8x32xf32> to vector<1x32xf32>
    %181 = vector.extract_strided_slice %173 {offsets = [6, 0], sizes = [1, 32], strides = [1, 1]} : vector<8x32xf32> to vector<1x32xf32>
    %182 = vector.extract_strided_slice %173 {offsets = [7, 0], sizes = [1, 32], strides = [1, 1]} : vector<8x32xf32> to vector<1x32xf32>
    %183 = tpu.concatenate %179, %180, %181, %182 in 1 : vector<1x32xf32>, vector<1x32xf32>, vector<1x32xf32>, vector<1x32xf32> -> vector<1x128xf32>
    %184 = tpu.concatenate %178, %183 in 0 : vector<1x128xf32>, vector<1x128xf32> -> vector<2x128xf32>
    %c0_75 = arith.constant 0 : index
    %c0_76 = arith.constant 0 : index
    %185 = vector.load %arg15[%c0_75, %c0_76] : memref<128x128xf32, #tpu.memory_space<vmem>>, vector<128x128xf32>
    %cst_77 = arith.constant dense<0.000000e+00> : vector<2x128xf32>
    %186 = tpu.matmul %184, %185, %cst_77 {dimension_numbers = #tpu.dot_dimension_numbers<[1], [0], [0], [1], [0, 0, 1, 1], [], []>} : vector<2x128xf32>, vector<128x128xf32>, vector<2x128xf32> -> vector<2x128xf32>
    %c0_78 = arith.constant 0 : index
    %c0_79 = arith.constant 0 : index
    %187 = vector.load %arg16[%c0_78, %c0_79] : memref<1x128xf32, #tpu.memory_space<vmem>>, vector<1x128xf32>
    %188 = vector.broadcast %187 : vector<1x128xf32> to vector<2x128xf32>
    %189 = arith.addf %186, %188 : vector<2x128xf32>
    %cst_80 = arith.constant 0.000000e+00 : f32
    %190 = vector.broadcast %cst_80 : f32 to vector<2x128xf32>
    %191 = arith.cmpf ogt, %189, %190 : vector<2x128xf32>
    %cst_81 = arith.constant 0.000000e+00 : f32
    %192 = vector.broadcast %cst_81 : f32 to vector<2x128xf32>
    %193 = arith.minimumf %189, %192 : vector<2x128xf32>
    %194 = math.exp %193 : vector<2x128xf32>
    %cst_82 = arith.constant 1.000000e+00 : f32
    %195 = vector.broadcast %cst_82 : f32 to vector<2x128xf32>
    %196 = arith.subf %194, %195 : vector<2x128xf32>
    %197 = arith.select %191, %189, %196 : vector<2x128xi1>, vector<2x128xf32>
    %c0_83 = arith.constant 0 : index
    %c0_84 = arith.constant 0 : index
    %198 = vector.load %arg17[%c0_83, %c0_84] : memref<128x128xf32, #tpu.memory_space<vmem>>, vector<128x128xf32>
    %cst_85 = arith.constant dense<0.000000e+00> : vector<2x128xf32>
    %199 = tpu.matmul %197, %198, %cst_85 {dimension_numbers = #tpu.dot_dimension_numbers<[1], [0], [0], [1], [0, 0, 1, 1], [], []>} : vector<2x128xf32>, vector<128x128xf32>, vector<2x128xf32> -> vector<2x128xf32>
    %c0_86 = arith.constant 0 : index
    %c0_87 = arith.constant 0 : index
    %200 = vector.load %arg18[%c0_86, %c0_87] : memref<1x128xf32, #tpu.memory_space<vmem>>, vector<1x128xf32>
    %201 = vector.broadcast %200 : vector<1x128xf32> to vector<2x128xf32>
    %202 = arith.addf %199, %201 : vector<2x128xf32>
    %c0_88 = arith.constant 0 : index
    %c0_89 = arith.constant 0 : index
    %203 = vector.load %arg19[%c0_88, %c0_89] : memref<2x128xf32, #tpu.memory_space<vmem>>, vector<2x128xf32>
    tpu.vector_store %arg19[%c0_88, %c0_89], %202 {strides = array<i32>} : memref<2x128xf32, #tpu.memory_space<vmem>>, vector<2x128xf32>,
    return
  }
  func.func @transform_0(%arg0: i32) -> (i32, i32) {
    %c0_i32 = arith.constant 0 : i32
    %c0_i32_0 = arith.constant 0 : i32
    %c0_i32_1 = arith.constant 0 : i32
    return %c0_i32, %c0_i32_0 : i32, i32
  }
  func.func @transform_1(%arg0: i32) -> (i32, i32) {
    %c0_i32 = arith.constant 0 : i32
    %c0_i32_0 = arith.constant 0 : i32
    %c0_i32_1 = arith.constant 0 : i32
    return %c0_i32, %c0_i32_0 : i32, i32
  }
  func.func @transform_2(%arg0: i32) -> (i32, i32) {
    %c0_i32 = arith.constant 0 : i32
    %c0_i32_0 = arith.constant 0 : i32
    %c0_i32_1 = arith.constant 0 : i32
    return %c0_i32, %c0_i32_0 : i32, i32
  }
  func.func @transform_3(%arg0: i32) -> (i32, i32) {
    %c0_i32 = arith.constant 0 : i32
    %c0_i32_0 = arith.constant 0 : i32
    %c0_i32_1 = arith.constant 0 : i32
    return %c0_i32, %c0_i32_0 : i32, i32
  }
  func.func @transform_4(%arg0: i32) -> (i32, i32) {
    %c0_i32 = arith.constant 0 : i32
    %c0_i32_0 = arith.constant 0 : i32
    %c0_i32_1 = arith.constant 0 : i32
    return %c0_i32, %c0_i32_0 : i32, i32
  }
  func.func @transform_5(%arg0: i32) -> (i32, i32) {
    %c0_i32 = arith.constant 0 : i32
    %c0_i32_0 = arith.constant 0 : i32
    %c0_i32_1 = arith.constant 0 : i32
    return %c0_i32, %c0_i32_0 : i32, i32
  }
  func.func @transform_6(%arg0: i32) -> (i32, i32) {
    %c0_i32 = arith.constant 0 : i32
    %c0_i32_0 = arith.constant 0 : i32
    %c0_i32_1 = arith.constant 0 : i32
    return %c0_i32, %c0_i32_0 : i32, i32
  }
  func.func @transform_7(%arg0: i32) -> (i32, i32) {
    %c0_i32 = arith.constant 0 : i32
    %c0_i32_0 = arith.constant 0 : i32
    %c0_i32_1 = arith.constant 0 : i32
    return %c0_i32, %c0_i32_0 : i32, i32
  }
  func.func @transform_8(%arg0: i32) -> (i32, i32) {
    %c0_i32 = arith.constant 0 : i32
    %c0_i32_0 = arith.constant 0 : i32
    %c0_i32_1 = arith.constant 0 : i32
    return %c0_i32, %c0_i32_0 : i32, i32
  }
  func.func @transform_9(%arg0: i32) -> (i32, i32) {
    %c0_i32 = arith.constant 0 : i32
    %c0_i32_0 = arith.constant 0 : i32
    %c0_i32_1 = arith.constant 0 : i32
    return %c0_i32, %c0_i32_0 : i32, i32
  }
  func.func @transform_10(%arg0: i32) -> (i32, i32) {
    %c0_i32 = arith.constant 0 : i32
    %c0_i32_0 = arith.constant 0 : i32
    %c0_i32_1 = arith.constant 0 : i32
    return %c0_i32, %c0_i32_0 : i32, i32
  }
  func.func @transform_11(%arg0: i32) -> (i32, i32) {
    %c0_i32 = arith.constant 0 : i32
    %c0_i32_0 = arith.constant 0 : i32
    %c0_i32_1 = arith.constant 0 : i32
    return %c0_i32, %c0_i32_0 : i32, i32
  }
  func.func @transform_12(%arg0: i32) -> (i32, i32) {
    %c0_i32 = arith.constant 0 : i32
    %c0_i32_0 = arith.constant 0 : i32
    %c0_i32_1 = arith.constant 0 : i32
    return %c0_i32, %c0_i32_0 : i32, i32
  }
  func.func @transform_13(%arg0: i32) -> (i32, i32) {
    %c0_i32 = arith.constant 0 : i32
    %c0_i32_0 = arith.constant 0 : i32
    %c0_i32_1 = arith.constant 0 : i32
    return %c0_i32, %c0_i32_0 : i32, i32
  }
  func.func @transform_14(%arg0: i32) -> (i32, i32) {
    %c0_i32 = arith.constant 0 : i32
    %c0_i32_0 = arith.constant 0 : i32
    %c0_i32_1 = arith.constant 0 : i32
    return %c0_i32, %c0_i32_0 : i32, i32
  }
  func.func @transform_15(%arg0: i32) -> (i32, i32) {
    %c0_i32 = arith.constant 0 : i32
    %c0_i32_0 = arith.constant 0 : i32
    %c0_i32_1 = arith.constant 0 : i32
    return %c0_i32, %c0_i32_0 : i32, i32
  }
  func.func @transform_16(%arg0: i32) -> (i32, i32) {
    %c0_i32 = arith.constant 0 : i32
    %c0_i32_0 = arith.constant 0 : i32
    %c0_i32_1 = arith.constant 0 : i32
    return %c0_i32, %c0_i32_0 : i32, i32
  }
  func.func @transform_17(%arg0: i32) -> (i32, i32) {
    %c0_i32 = arith.constant 0 : i32
    %c0_i32_0 = arith.constant 0 : i32
    %c0_i32_1 = arith.constant 0 : i32
    return %c0_i32, %c0_i32_0 : i32, i32
  }
  func.func @transform_18(%arg0: i32) -> (i32, i32) {
    %c0_i32 = arith.constant 0 : i32
    %c0_i32_0 = arith.constant 0 : i32
    %c0_i32_1 = arith.constant 0 : i32
    return %c0_i32, %c0_i32_0 : i32, i32
  }
}

</mosaic_0001>

<llo_original>
// kernel: forward.1
$region0: #{forward.1}
  #allocation0 [shape = 'u32[]', space=smem, size = 0x4, offset = 0x4, fixed_abs, tag = 'smem constant byte address 0x4 - core index']
  #allocation1 [shape = 'u32[144,128]{1,0:T(1,128)}', space=vmem, size = 0x12000, scoped, tag = 'internal scratch']
  #allocation2 [shape = 'f32[1,1]{1,0:T(1,128)S(1)}', space=vmem, size = 0x200, scoped, tag = 'scoped memory for forward.1']
  %s0 = inlined_call_operand.vmem [shape: f32[32,32], index: 0, kind: input, shape index: {}]
  %s1 = inlined_call_operand.vmem [shape: f32[32,4], index: 1, kind: input, shape index: {}]
  %s2 = inlined_call_operand.vmem [shape: f32[8,32], index: 2, kind: input, shape index: {}]
  %s3 = inlined_call_operand.vmem [shape: f32[1,32], index: 3, kind: input, shape index: {}]
  %s4 = inlined_call_operand.vmem [shape: f32[64,32], index: 4, kind: input, shape index: {}]
  %s5 = inlined_call_operand.vmem [shape: f32[1,32], index: 5, kind: input, shape index: {}]
  %s6 = inlined_call_operand.vmem [shape: f32[64,1], index: 6, kind: input, shape index: {}]
  %s7 = inlined_call_operand.<no memory space> [shape: f32[1,1], index: 7, kind: input, shape index: {}]
  %s8 = inlined_call_operand.vmem [shape: f32[32,16], index: 8, kind: input, shape index: {}]
  %s9 = inlined_call_operand.vmem [shape: f32[32,16], index: 9, kind: input, shape index: {}]
  %s10 = inlined_call_operand.vmem [shape: f32[1,16], index: 10, kind: input, shape index: {}]
  %s11 = inlined_call_operand.vmem [shape: f32[1,16], index: 11, kind: input, shape index: {}]
  %s12 = inlined_call_operand.vmem [shape: f32[80,32], index: 12, kind: input, shape index: {}]
  %s13 = inlined_call_operand.vmem [shape: f32[1,32], index: 13, kind: input, shape index: {}]
  %s14 = inlined_call_operand.vmem [shape: f32[128,128], index: 14, kind: input, shape index: {}]
  %s15 = inlined_call_operand.vmem [shape: f32[1,128], index: 15, kind: input, shape index: {}]
  %s16 = inlined_call_operand.vmem [shape: f32[128,128], index: 16, kind: input, shape index: {}]
  %s17 = inlined_call_operand.vmem [shape: f32[1,128], index: 17, kind: input, shape index: {}]
  %s18 = inlined_call_operand.hbm [shape: f32[2,128], index: 18, kind: output, shape index: {}]
  %s19 = sld [smem:[#allocation0]]
  $region82: #{forward.1} parent=0
    _
  %s21 = ssub.s32 1, %s19
  %s22 = scalar_select 0, %s21, %s19
  %v23 = vstv %s7
  %24 = vst [vmem:[#allocation2] sm:$0x1] %v23
  $region1: #{forward.1} parent=0
    #allocation3 [shape = 'u8[1024]{0}', space=vmem, size = 0x400, scoped, tag = 'output window, operand 0, single buffered']
    #allocation4 [shape = 's32[1]{0}', space=sflag, size = 0x4, scoped, tag = 'scoped memory for forward.1']
    %25 = vsyncpa [#allocation4], 0
    // Predicated region
    $region2: #{forward.1} parent=1 // pred_check
      _
    $region3: #{forward.1} parent=1 // pred_check_branch
      %27 = sbr.rel (0) target = $region5
    $region4: #{forward.1} parent=1 // pred_region
      _
    $region5: #{forward.1} parent=1 // pred_fallthru
      _
    // Predicated region
    $region6: #{forward.1} parent=1 // pred_check
      _
    $region7: #{forward.1} parent=1 // pred_check_branch
      %29 = sbr.rel (0) target = $region9
    $region8: #{forward.1} parent=1 // pred_region
      _
    $region9: #{forward.1} parent=1 // pred_fallthru
      _
    // Predicated region
    $region10: #{forward.1} parent=1 // pred_check
      _
    $region11: #{forward.1} parent=1 // pred_check_branch
      %31 = sbr.rel (0) target = $region13
    $region12: #{forward.1} parent=1 // pred_region
      _
    $region13: #{forward.1} parent=1 // pred_fallthru
      _
    // Predicated region
    $region14: #{forward.1} parent=1 // pred_check
      _
    $region15: #{forward.1} parent=1 // pred_check_branch
      %33 = sbr.rel (0) target = $region17
    $region16: #{forward.1} parent=1 // pred_region
      _
    $region17: #{forward.1} parent=1 // pred_fallthru
      _
    // Predicated region
    $region18: #{forward.1} parent=1 // pred_check
      _
    $region19: #{forward.1} parent=1 // pred_check_branch
      %35 = sbr.rel (0) target = $region21
    $region20: #{forward.1} parent=1 // pred_region
      _
    $region21: #{forward.1} parent=1 // pred_fallthru
      _
    // Predicated region
    $region22: #{forward.1} parent=1 // pred_check
      _
    $region23: #{forward.1} parent=1 // pred_check_branch
      %37 = sbr.rel (0) target = $region25
    $region24: #{forward.1} parent=1 // pred_region
      _
    $region25: #{forward.1} parent=1 // pred_fallthru
      _
    // Predicated region
    $region26: #{forward.1} parent=1 // pred_check
      _
    $region27: #{forward.1} parent=1 // pred_check_branch
      %39 = sbr.rel (0) target = $region29
    $region28: #{forward.1} parent=1 // pred_region
      _
    $region29: #{forward.1} parent=1 // pred_fallthru
      _
    // Predicated region
    $region30: #{forward.1} parent=1 // pred_check
      _
    $region31: #{forward.1} parent=1 // pred_check_branch
      %41 = sbr.rel (0) target = $region33
    $region32: #{forward.1} parent=1 // pred_region
      _
    $region33: #{forward.1} parent=1 // pred_fallthru
      _
    // Predicated region
    $region34: #{forward.1} parent=1 // pred_check
      _
    $region35: #{forward.1} parent=1 // pred_check_branch
      %43 = sbr.rel (0) target = $region37
    $region36: #{forward.1} parent=1 // pred_region
      _
    $region37: #{forward.1} parent=1 // pred_fallthru
      _
    // Predicated region
    $region38: #{forward.1} parent=1 // pred_check
      _
    $region39: #{forward.1} parent=1 // pred_check_branch
      %45 = sbr.rel (0) target = $region41
    $region40: #{forward.1} parent=1 // pred_region
      _
    $region41: #{forward.1} parent=1 // pred_fallthru
      _
    // Predicated region
    $region42: #{forward.1} parent=1 // pred_check
      _
    $region43: #{forward.1} parent=1 // pred_check_branch
      %47 = sbr.rel (0) target = $region45
    $region44: #{forward.1} parent=1 // pred_region
      _
    $region45: #{forward.1} parent=1 // pred_fallthru
      _
    // Predicated region
    $region46: #{forward.1} parent=1 // pred_check
      _
    $region47: #{forward.1} parent=1 // pred_check_branch
      %49 = sbr.rel (0) target = $region49
    $region48: #{forward.1} parent=1 // pred_region
      _
    $region49: #{forward.1} parent=1 // pred_fallthru
      _
    // Predicated region
    $region50: #{forward.1} parent=1 // pred_check
      _
    $region51: #{forward.1} parent=1 // pred_check_branch
      %51 = sbr.rel (0) target = $region53
    $region52: #{forward.1} parent=1 // pred_region
      _
    $region53: #{forward.1} parent=1 // pred_fallthru
      _
    // Predicated region
    $region54: #{forward.1} parent=1 // pred_check
      _
    $region55: #{forward.1} parent=1 // pred_check_branch
      %53 = sbr.rel (0) target = $region57
    $region56: #{forward.1} parent=1 // pred_region
      _
    $region57: #{forward.1} parent=1 // pred_fallthru
      _
    // Predicated region
    $region58: #{forward.1} parent=1 // pred_check
      _
    $region59: #{forward.1} parent=1 // pred_check_branch
      %55 = sbr.rel (0) target = $region61
    $region60: #{forward.1} parent=1 // pred_region
      _
    $region61: #{forward.1} parent=1 // pred_fallthru
      _
    // Predicated region
    $region62: #{forward.1} parent=1 // pred_check
      _
    $region63: #{forward.1} parent=1 // pred_check_branch
      %57 = sbr.rel (0) target = $region65
    $region64: #{forward.1} parent=1 // pred_region
      _
    $region65: #{forward.1} parent=1 // pred_fallthru
      _
    // Predicated region
    $region66: #{forward.1} parent=1 // pred_check
      _
    $region67: #{forward.1} parent=1 // pred_check_branch
      %59 = sbr.rel (0) target = $region69
    $region68: #{forward.1} parent=1 // pred_region
      _
    $region69: #{forward.1} parent=1 // pred_fallthru
      _
    // Predicated region
    $region70: #{forward.1} parent=1 // pred_check
      _
    $region71: #{forward.1} parent=1 // pred_check_branch
      %61 = sbr.rel (0) target = $region73
    $region72: #{forward.1} parent=1 // pred_region
      _
    $region73: #{forward.1} parent=1 // pred_fallthru
      _
    %v62 = vld [vmem:[%s0] sm:$0xff]
    %v63 = vld [vmem:[%s0 + $0x8] sm:$0xff]
    %v64 = vld [vmem:[%s0 + $0x10] sm:$0xff]
    %v65 = vld [vmem:[%s0 + $0x18] sm:$0xff]
    %v66 = vld [vmem:[%s1] sm:$0xff]
    %v67 = vld [vmem:[%s1 + $0x8] sm:$0xff]
    %v68 = vld [vmem:[%s1 + $0x10] sm:$0xff]
    %v69 = vld [vmem:[%s1 + $0x18] sm:$0xff]
    %vm70 = vcmask 261120
    %v72 = vsel %vm70, %v62, 0
    %v75 = vsel %vm70, %v63, 0
    %v78 = vsel %vm70, %v64, 0
    %v81 = vsel %vm70, %v65, 0
    %83 = vmatprep.subr.mxu0 0.0
    %84 = vmatpush1.msra.mxu0 %v66
    %85 = vmatprep.subr.mxu0 0.0
    %86 = vmatpush1.msra.mxu0 %v67
    %87 = vmatprep.subr.mxu0 0.0
    %88 = vmatpush1.msra.mxu0 %v68
    %89 = vmatprep.subr.mxu0 0.0
    %90 = vmatpush1.msra.mxu0 %v69
    %91 = vmatprep.subr.mxu0 0.0
    %92 = vmatpush1.msra.mxu0 0.0
    %93 = vmatprep.subr.mxu0 0.0
    %94 = vmatpush1.msra.mxu0 0.0
    %95 = vmatprep.subr.mxu0 0.0
    %96 = vmatpush1.msra.mxu0 0.0
    %97 = vmatprep.subr.mxu0 0.0
    %98 = vmatpush1.msra.mxu0 0.0
    %99 = vmatprep.subr.mxu0 0.0
    %100 = vmatpush1.msra.mxu0 0.0
    %101 = vmatprep.subr.mxu0 0.0
    %102 = vmatpush1.msra.mxu0 0.0
    %103 = vmatprep.subr.mxu0 0.0
    %104 = vmatpush1.msra.mxu0 0.0
    %105 = vmatprep.subr.mxu0 0.0
    %106 = vmatpush1.msra.mxu0 0.0
    %107 = vmatprep.subr.mxu0 0.0
    %108 = vmatpush1.msra.mxu0 0.0
    %109 = vmatprep.subr.mxu0 0.0
    %110 = vmatpush1.msra.mxu0 0.0
    %111 = vmatprep.subr.mxu0 0.0
    %112 = vmatpush1.msra.mxu0 0.0
    %113 = vmatprep.subr.mxu0 0.0
    %114 = vmatpush1.msra.mxu0 0.0
    %115 = vmatprep.subr.mxu0 0.0
    %116 = vmatpush1.msra.mxu0 0.0
    %117 = vmatprep.subr.mxu0 0.0
    %118 = vmatpush1.msra.mxu0 0.0
    %119 = vmatprep.subr.mxu0 0.0
    %120 = vmatpush1.msra.mxu0 0.0
    %121 = vmatprep.subr.mxu0 0.0
    %122 = vmatpush1.msra.mxu0 0.0
    %123 = vmatprep.subr.mxu0 0.0
    %124 = vmatpush1.msra.mxu0 0.0
    %125 = vmatprep.subr.mxu0 0.0
    %126 = vmatpush1.msra.mxu0 0.0
    %127 = vmatprep.subr.mxu0 0.0
    %128 = vmatpush1.msra.mxu0 0.0
    %129 = vmatprep.subr.mxu0 0.0
    %130 = vmatpush1.msra.mxu0 0.0
    %131 = vmatprep.subr.mxu0 0.0
    %132 = vmatpush1.msra.mxu0 0.0
    %133 = vmatprep.subr.mxu0 0.0
    %134 = vmatpush1.msra.mxu0 0.0
    %135 = vmatprep.subr.mxu0 0.0
    %136 = vmatpush1.msra.mxu0 0.0
    %137 = vmatprep.subr.mxu0 0.0
    %138 = vmatpush1.msra.mxu0 0.0
    %139 = vmatprep.subr.mxu0 0.0
    %140 = vmatpush1.msra.mxu0 0.0
    %141 = vmatprep.subr.mxu0 0.0
    %142 = vmatpush1.msra.mxu0 0.0
    %143 = vmatprep.subr.mxu0 0.0
    %144 = vmatpush1.msra.mxu0 0.0
    %145 = vmatprep.subr.mxu0 0.0
    %146 = vmatpush1.msra.mxu0 0.0
    %147 = vmatprep.mubr.f32.mxu0 0.0
    %148 = vmatmul.mubr.f32.gmra.mrb[0].mxu0 %v72
    %v149 = vpop.f32.mrb[0].mxu0
    %v150 = vadd.f32 0.0, %v149
    %v151 = vpop.f32.mrb[0].mxu0
    %152 = vmatprep.mubr.f32.mxu0 0.0
    %153 = vmatmul.mubr.f32.gmra.mrb[0].mxu0 %v75
    %v154 = vpop.f32.mrb[0].mxu0
    %v155 = vadd.f32 0.0, %v154
    %v156 = vpop.f32.mrb[0].mxu0
    %157 = vmatprep.mubr.f32.mxu0 0.0
    %158 = vmatmul.mubr.f32.gmra.mrb[0].mxu0 %v78
    %v159 = vpop.f32.mrb[0].mxu0
    %v160 = vadd.f32 0.0, %v159
    %v161 = vpop.f32.mrb[0].mxu0
    %162 = vmatprep.mubr.f32.mxu0 0.0
    %163 = vmatmul.mubr.f32.gmra.mrb[0].mxu0 %v81
    %v164 = vpop.f32.mrb[0].mxu0
    %v165 = vadd.f32 0.0, %v164
    %v166 = vpop.f32.mrb[0].mxu0
    %167 = vdwg.mxu0
    %172 = vrot.lane.b32.xlu0 %v66, 4
    %v173 = vpop.permute.xlu0 %172
    %174 = vrot.lane.b32.xlu0 %v67, 4
    %v175 = vpop.permute.xlu0 %174
    %176 = vrot.lane.b32.xlu0 %v68, 4
    %v177 = vpop.permute.xlu0 %176
    %178 = vrot.lane.b32.xlu0 %v69, 4
    %v179 = vpop.permute.xlu0 %178
    %vm184 = vcmask 31744
    %v185 = vsel %vm184, %v150, %v173
    %v186 = vsel %vm184, %v155, %v175
    %v187 = vsel %vm184, %v160, %v177
    %v188 = vsel %vm184, %v165, %v179
    %v189 = vld [vmem:[%s2] sm:$0xff]
    %v190 = vld [vmem:[%s3] sm:$0x1]
    %v192 = vlaneseq
    %v193 = vshrl.u32 %v192, 7
    %v194 = vsub.s32 0, %v193
    %v195 = vrot.slane %v190, %v194
    %vm197 = vcmask 64512
    %v199 = vsel %vm197, %v185, 0
    %v202 = vsel %vm197, %v186, 0
    %v205 = vsel %vm197, %v187, 0
    %v208 = vsel %vm197, %v188, 0
    %210 = vmatprep.subr.mxu0 0.0
    %211 = vmatpush1.msra.mxu0 %v189
    %212 = vmatprep.subr.mxu0 0.0
    %213 = vmatpush1.msra.mxu0 0.0
    %214 = vmatprep.subr.mxu0 0.0
    %215 = vmatpush1.msra.mxu0 0.0
    %216 = vmatprep.subr.mxu0 0.0
    %217 = vmatpush1.msra.mxu0 0.0
    %218 = vmatprep.subr.mxu0 0.0
    %219 = vmatpush1.msra.mxu0 0.0
    %220 = vmatprep.subr.mxu0 0.0
    %221 = vmatpush1.msra.mxu0 0.0
    %222 = vmatprep.subr.mxu0 0.0
    %223 = vmatpush1.msra.mxu0 0.0
    %224 = vmatprep.subr.mxu0 0.0
    %225 = vmatpush1.msra.mxu0 0.0
    %226 = vmatprep.subr.mxu0 0.0
    %227 = vmatpush1.msra.mxu0 0.0
    %228 = vmatprep.subr.mxu0 0.0
    %229 = vmatpush1.msra.mxu0 0.0
    %230 = vmatprep.subr.mxu0 0.0
    %231 = vmatpush1.msra.mxu0 0.0
    %232 = vmatprep.subr.mxu0 0.0
    %233 = vmatpush1.msra.mxu0 0.0
    %234 = vmatprep.subr.mxu0 0.0
    %235 = vmatpush1.msra.mxu0 0.0
    %236 = vmatprep.subr.mxu0 0.0
    %237 = vmatpush1.msra.mxu0 0.0
    %238 = vmatprep.subr.mxu0 0.0
    %239 = vmatpush1.msra.mxu0 0.0
    %240 = vmatprep.subr.mxu0 0.0
    %241 = vmatpush1.msra.mxu0 0.0
    %242 = vmatprep.subr.mxu0 0.0
    %243 = vmatpush1.msra.mxu0 0.0
    %244 = vmatprep.subr.mxu0 0.0
    %245 = vmatpush1.msra.mxu0 0.0
    %246 = vmatprep.subr.mxu0 0.0
    %247 = vmatpush1.msra.mxu0 0.0
    %248 = vmatprep.subr.mxu0 0.0
    %249 = vmatpush1.msra.mxu0 0.0
    %250 = vmatprep.subr.mxu0 0.0
    %251 = vmatpush1.msra.mxu0 0.0
    %252 = vmatprep.subr.mxu0 0.0
    %253 = vmatpush1.msra.mxu0 0.0
    %254 = vmatprep.subr.mxu0 0.0
    %255 = vmatpush1.msra.mxu0 0.0
    %256 = vmatprep.subr.mxu0 0.0
    %257 = vmatpush1.msra.mxu0 0.0
    %258 = vmatprep.subr.mxu0 0.0
    %259 = vmatpush1.msra.mxu0 0.0
    %260 = vmatprep.subr.mxu0 0.0
    %261 = vmatpush1.msra.mxu0 0.0
    %262 = vmatprep.subr.mxu0 0.0
    %263 = vmatpush1.msra.mxu0 0.0
    %264 = vmatprep.subr.mxu0 0.0
    %265 = vmatpush1.msra.mxu0 0.0
    %266 = vmatprep.subr.mxu0 0.0
    %267 = vmatpush1.msra.mxu0 0.0
    %268 = vmatprep.subr.mxu0 0.0
    %269 = vmatpush1.msra.mxu0 0.0
    %270 = vmatprep.subr.mxu0 0.0
    %271 = vmatpush1.msra.mxu0 0.0
    %272 = vmatprep.subr.mxu0 0.0
    %273 = vmatpush1.msra.mxu0 0.0
    %274 = vmatprep.mubr.f32.mxu0 0.0
    %275 = vmatmul.mubr.f32.gmra.mrb[0].mxu0 %v199
    %v276 = vpop.f32.mrb[0].mxu0
    %v277 = vadd.f32 %v195, %v276
    %v278 = vpop.f32.mrb[0].mxu0
    %279 = vmatprep.mubr.f32.mxu0 0.0
    %280 = vmatmul.mubr.f32.gmra.mrb[0].mxu0 %v202
    %v281 = vpop.f32.mrb[0].mxu0
    %v282 = vadd.f32 %v195, %v281
    %v283 = vpop.f32.mrb[0].mxu0
    %284 = vmatprep.mubr.f32.mxu0 0.0
    %285 = vmatmul.mubr.f32.gmra.mrb[0].mxu0 %v205
    %v286 = vpop.f32.mrb[0].mxu0
    %v287 = vadd.f32 %v195, %v286
    %v288 = vpop.f32.mrb[0].mxu0
    %289 = vmatprep.mubr.f32.mxu0 0.0
    %290 = vmatmul.mubr.f32.gmra.mrb[0].mxu0 %v208
    %v291 = vpop.f32.mrb[0].mxu0
    %v292 = vadd.f32 %v195, %v291
    %v293 = vpop.f32.mrb[0].mxu0
    %294 = vdwg.mxu0
    %vm295 = vcmp.gt.f32.partialorder %v277, 0.0
    %vm296 = vcmp.gt.f32.partialorder %v282, 0.0
    %vm297 = vcmp.gt.f32.partialorder %v287, 0.0
    %vm298 = vcmp.gt.f32.partialorder %v292, 0.0
    %v299 = vmin.f32 %v277, 0.0
    %v300 = vmin.f32 %v282, 0.0
    %v301 = vmin.f32 %v287, 0.0
    %v302 = vmin.f32 %v292, 0.0
    %v303 = vmul.f32 %v299, 1.442695
    %v304 = vpow.pop %v303
    %v305 = vmul.f32 %v300, 1.442695
    %v306 = vpow.pop %v305
    %v307 = vmul.f32 %v301, 1.442695
    %v308 = vpow.pop %v307
    %v309 = vmul.f32 %v302, 1.442695
    %v310 = vpow.pop %v309
    %v311 = vsub.f32 %v304, 1.0
    %v312 = vsub.f32 %v306, 1.0
    %v313 = vsub.f32 %v308, 1.0
    %v314 = vsub.f32 %v310, 1.0
    %v315 = vsel %vm295, %v277, %v311
    %v316 = vsel %vm296, %v282, %v312
    %v317 = vsel %vm297, %v287, %v313
    %v318 = vsel %vm298, %v292, %v314
    %319 = vmatprep.subr.mxu0 0.0
    %320 = vmatpush1.msra.mxu0 %v315
    %321 = vmatprep.subr.mxu0 0.0
    %322 = vmatpush1.msra.mxu0 %v316
    %323 = vmatprep.subr.mxu0 0.0
    %324 = vmatpush1.msra.mxu0 %v317
    %325 = vmatprep.subr.mxu0 0.0
    %326 = vmatpush1.msra.mxu0 %v318
    %327 = vmatprep.subr.mxu0 0.0
    %328 = vmatpush1.msra.mxu0 0.0
    %329 = vmatprep.subr.mxu0 0.0
    %330 = vmatpush1.msra.mxu0 0.0
    %331 = vmatprep.subr.mxu0 0.0
    %332 = vmatpush1.msra.mxu0 0.0
    %333 = vmatprep.subr.mxu0 0.0
    %334 = vmatpush1.msra.mxu0 0.0
    %335 = vmatprep.subr.mxu0 0.0
    %336 = vmatpush1.msra.mxu0 0.0
    %337 = vmatprep.subr.mxu0 0.0
    %338 = vmatpush1.msra.mxu0 0.0
    %339 = vmatprep.subr.mxu0 0.0
    %340 = vmatpush1.msra.mxu0 0.0
    %341 = vmatprep.subr.mxu0 0.0
    %342 = vmatpush1.msra.mxu0 0.0
    %343 = vmatprep.subr.mxu0 0.0
    %344 = vmatpush1.msra.mxu0 0.0
    %345 = vmatprep.subr.mxu0 0.0
    %346 = vmatpush1.msra.mxu0 0.0
    %347 = vmatprep.subr.mxu0 0.0
    %348 = vmatpush1.msra.mxu0 0.0
    %349 = vmatprep.subr.mxu0 0.0
    %350 = vmatpush1.msra.mxu0 0.0
    %351 = vmatprep.subr.mxu0 0.0
    %352 = vmatpush1.msra.mxu0 0.0
    %353 = vmatprep.subr.mxu0 0.0
    %354 = vmatpush1.msra.mxu0 0.0
    %355 = vmatprep.subr.mxu0 0.0
    %356 = vmatpush1.msra.mxu0 0.0
    %357 = vmatprep.subr.mxu0 0.0
    %358 = vmatpush1.msra.mxu0 0.0
    %359 = vmatprep.subr.mxu0 0.0
    %360 = vmatpush1.msra.mxu0 0.0
    %361 = vmatprep.subr.mxu0 0.0
    %362 = vmatpush1.msra.mxu0 0.0
    %363 = vmatprep.subr.mxu0 0.0
    %364 = vmatpush1.msra.mxu0 0.0
    %365 = vmatprep.subr.mxu0 0.0
    %366 = vmatpush1.msra.mxu0 0.0
    %367 = vmatprep.subr.mxu0 0.0
    %368 = vmatpush1.msra.mxu0 0.0
    %369 = vmatprep.subr.mxu0 0.0
    %370 = vmatpush1.msra.mxu0 0.0
    %371 = vmatprep.subr.mxu0 0.0
    %372 = vmatpush1.msra.mxu0 0.0
    %373 = vmatprep.subr.mxu0 0.0
    %374 = vmatpush1.msra.mxu0 0.0
    %375 = vmatprep.subr.mxu0 0.0
    %376 = vmatpush1.msra.mxu0 0.0
    %377 = vmatprep.subr.mxu0 0.0
    %378 = vmatpush1.msra.mxu0 0.0
    %379 = vmatprep.subr.mxu0 0.0
    %380 = vmatpush1.msra.mxu0 0.0
    %381 = vmatprep.subr.mxu0 0.0
    %382 = vmatpush1.msra.mxu0 0.0
    %383 = vmatprep.mubr.f32.mxu0 0.0
    %384 = vmatmul.mubr.f32.gmra.mrb[0].mxu0 %v72
    %v385 = vpop.f32.mrb[0].mxu0
    %v386 = vadd.f32 0.0, %v385
    %v387 = vpop.f32.mrb[0].mxu0
    %388 = vmatprep.mubr.f32.mxu0 0.0
    %389 = vmatmul.mubr.f32.gmra.mrb[0].mxu0 %v75
    %v390 = vpop.f32.mrb[0].mxu0
    %v391 = vadd.f32 0.0, %v390
    %v392 = vpop.f32.mrb[0].mxu0
    %393 = vmatprep.mubr.f32.mxu0 0.0
    %394 = vmatmul.mubr.f32.gmra.mrb[0].mxu0 %v78
    %v395 = vpop.f32.mrb[0].mxu0
    %v396 = vadd.f32 0.0, %v395
    %v397 = vpop.f32.mrb[0].mxu0
    %398 = vmatprep.mubr.f32.mxu0 0.0
    %399 = vmatmul.mubr.f32.gmra.mrb[0].mxu0 %v81
    %v400 = vpop.f32.mrb[0].mxu0
    %v401 = vadd.f32 0.0, %v400
    %v402 = vpop.f32.mrb[0].mxu0
    %403 = vdwg.mxu0
    %408 = vrot.lane.b32.xlu0 %v315, 32
    %v409 = vpop.permute.xlu0 %408
    %410 = vrot.lane.b32.xlu0 %v316, 32
    %v411 = vpop.permute.xlu0 %410
    %412 = vrot.lane.b32.xlu0 %v317, 32
    %v413 = vpop.permute.xlu0 %412
    %414 = vrot.lane.b32.xlu0 %v318, 32
    %v415 = vpop.permute.xlu0 %414
    %v420 = vsel %vm70, %v386, %v409
    %v421 = vsel %vm70, %v391, %v411
    %v422 = vsel %vm70, %v396, %v413
    %v423 = vsel %vm70, %v401, %v415
    %v424 = vld [vmem:[%s4] sm:$0xff]
    %v425 = vld [vmem:[%s4 + $0x8] sm:$0xff]
    %v426 = vld [vmem:[%s4 + $0x10] sm:$0xff]
    %v427 = vld [vmem:[%s4 + $0x18] sm:$0xff]
    %v428 = vld [vmem:[%s4 + $0x20] sm:$0xff]
    %v429 = vld [vmem:[%s4 + $0x28] sm:$0xff]
    %v430 = vld [vmem:[%s4 + $0x30] sm:$0xff]
    %v431 = vld [vmem:[%s4 + $0x38] sm:$0xff]
    %v432 = vld [vmem:[%s5] sm:$0x1]
    %v434 = vlaneseq
    %v435 = vshrl.u32 %v434, 7
    %v436 = vsub.s32 0, %v435
    %v437 = vrot.slane %v432, %v436
    %vm439 = vcmask 523264
    %v441 = vsel %vm439, %v420, 0
    %v444 = vsel %vm439, %v421, 0
    %v447 = vsel %vm439, %v422, 0
    %v450 = vsel %vm439, %v423, 0
    %452 = vmatprep.subr.mxu0 0.0
    %453 = vmatpush1.msra.mxu0 %v424
    %454 = vmatprep.subr.mxu0 0.0
    %455 = vmatpush1.msra.mxu0 %v425
    %456 = vmatprep.subr.mxu0 0.0
    %457 = vmatpush1.msra.mxu0 %v426
    %458 = vmatprep.subr.mxu0 0.0
    %459 = vmatpush1.msra.mxu0 %v427
    %460 = vmatprep.subr.mxu0 0.0
    %461 = vmatpush1.msra.mxu0 %v428
    %462 = vmatprep.subr.mxu0 0.0
    %463 = vmatpush1.msra.mxu0 %v429
    %464 = vmatprep.subr.mxu0 0.0
    %465 = vmatpush1.msra.mxu0 %v430
    %466 = vmatprep.subr.mxu0 0.0
    %467 = vmatpush1.msra.mxu0 %v431
    %468 = vmatprep.subr.mxu0 0.0
    %469 = vmatpush1.msra.mxu0 0.0
    %470 = vmatprep.subr.mxu0 0.0
    %471 = vmatpush1.msra.mxu0 0.0
    %472 = vmatprep.subr.mxu0 0.0
    %473 = vmatpush1.msra.mxu0 0.0
    %474 = vmatprep.subr.mxu0 0.0
    %475 = vmatpush1.msra.mxu0 0.0
    %476 = vmatprep.subr.mxu0 0.0
    %477 = vmatpush1.msra.mxu0 0.0
    %478 = vmatprep.subr.mxu0 0.0
    %479 = vmatpush1.msra.mxu0 0.0
    %480 = vmatprep.subr.mxu0 0.0
    %481 = vmatpush1.msra.mxu0 0.0
    %482 = vmatprep.subr.mxu0 0.0
    %483 = vmatpush1.msra.mxu0 0.0
    %484 = vmatprep.subr.mxu0 0.0
    %485 = vmatpush1.msra.mxu0 0.0
    %486 = vmatprep.subr.mxu0 0.0
    %487 = vmatpush1.msra.mxu0 0.0
    %488 = vmatprep.subr.mxu0 0.0
    %489 = vmatpush1.msra.mxu0 0.0
    %490 = vmatprep.subr.mxu0 0.0
    %491 = vmatpush1.msra.mxu0 0.0
    %492 = vmatprep.subr.mxu0 0.0
    %493 = vmatpush1.msra.mxu0 0.0
    %494 = vmatprep.subr.mxu0 0.0
    %495 = vmatpush1.msra.mxu0 0.0
    %496 = vmatprep.subr.mxu0 0.0
    %497 = vmatpush1.msra.mxu0 0.0
    %498 = vmatprep.subr.mxu0 0.0
    %499 = vmatpush1.msra.mxu0 0.0
    %500 = vmatprep.subr.mxu0 0.0
    %501 = vmatpush1.msra.mxu0 0.0
    %502 = vmatprep.subr.mxu0 0.0
    %503 = vmatpush1.msra.mxu0 0.0
    %504 = vmatprep.subr.mxu0 0.0
    %505 = vmatpush1.msra.mxu0 0.0
    %506 = vmatprep.subr.mxu0 0.0
    %507 = vmatpush1.msra.mxu0 0.0
    %508 = vmatprep.subr.mxu0 0.0
    %509 = vmatpush1.msra.mxu0 0.0
    %510 = vmatprep.subr.mxu0 0.0
    %511 = vmatpush1.msra.mxu0 0.0
    %512 = vmatprep.subr.mxu0 0.0
    %513 = vmatpush1.msra.mxu0 0.0
    %514 = vmatprep.subr.mxu0 0.0
    %515 = vmatpush1.msra.mxu0 0.0
    %516 = vmatprep.mubr.f32.mxu0 0.0
    %517 = vmatmul.mubr.f32.gmra.mrb[0].mxu0 %v441
    %v518 = vpop.f32.mrb[0].mxu0
    %v519 = vadd.f32 %v437, %v518
    %v520 = vpop.f32.mrb[0].mxu0
    %521 = vmatprep.mubr.f32.mxu0 0.0
    %522 = vmatmul.mubr.f32.gmra.mrb[0].mxu0 %v444
    %v523 = vpop.f32.mrb[0].mxu0
    %v524 = vadd.f32 %v437, %v523
    %v525 = vpop.f32.mrb[0].mxu0
    %526 = vmatprep.mubr.f32.mxu0 0.0
    %527 = vmatmul.mubr.f32.gmra.mrb[0].mxu0 %v447
    %v528 = vpop.f32.mrb[0].mxu0
    %v529 = vadd.f32 %v437, %v528
    %v530 = vpop.f32.mrb[0].mxu0
    %531 = vmatprep.mubr.f32.mxu0 0.0
    %532 = vmatmul.mubr.f32.gmra.mrb[0].mxu0 %v450
    %v533 = vpop.f32.mrb[0].mxu0
    %v534 = vadd.f32 %v437, %v533
    %v535 = vpop.f32.mrb[0].mxu0
    %536 = vdwg.mxu0
    %vm537 = vcmp.gt.f32.partialorder %v519, 0.0
    %vm538 = vcmp.gt.f32.partialorder %v524, 0.0
    %vm539 = vcmp.gt.f32.partialorder %v529, 0.0
    %vm540 = vcmp.gt.f32.partialorder %v534, 0.0
    %v541 = vmin.f32 %v519, 0.0
    %v542 = vmin.f32 %v524, 0.0
    %v543 = vmin.f32 %v529, 0.0
    %v544 = vmin.f32 %v534, 0.0
    %v545 = vmul.f32 %v541, 1.442695
    %v546 = vpow.pop %v545
    %v547 = vmul.f32 %v542, 1.442695
    %v548 = vpow.pop %v547
    %v549 = vmul.f32 %v543, 1.442695
    %v550 = vpow.pop %v549
    %v551 = vmul.f32 %v544, 1.442695
    %v552 = vpow.pop %v551
    %v553 = vsub.f32 %v546, 1.0
    %v554 = vsub.f32 %v548, 1.0
    %v555 = vsub.f32 %v550, 1.0
    %v556 = vsub.f32 %v552, 1.0
    %v557 = vsel %vm537, %v519, %v553
    %v558 = vsel %vm538, %v524, %v554
    %v559 = vsel %vm539, %v529, %v555
    %v560 = vsel %vm540, %v534, %v556
    %561 = vmatprep.subr.mxu0 0.0
    %562 = vmatpush1.msra.mxu0 %v557
    %563 = vmatprep.subr.mxu0 0.0
    %564 = vmatpush1.msra.mxu0 %v558
    %565 = vmatprep.subr.mxu0 0.0
    %566 = vmatpush1.msra.mxu0 %v559
    %567 = vmatprep.subr.mxu0 0.0
    %568 = vmatpush1.msra.mxu0 %v560
    %569 = vmatprep.subr.mxu0 0.0
    %570 = vmatpush1.msra.mxu0 0.0
    %571 = vmatprep.subr.mxu0 0.0
    %572 = vmatpush1.msra.mxu0 0.0
    %573 = vmatprep.subr.mxu0 0.0
    %574 = vmatpush1.msra.mxu0 0.0
    %575 = vmatprep.subr.mxu0 0.0
    %576 = vmatpush1.msra.mxu0 0.0
    %577 = vmatprep.subr.mxu0 0.0
    %578 = vmatpush1.msra.mxu0 0.0
    %579 = vmatprep.subr.mxu0 0.0
    %580 = vmatpush1.msra.mxu0 0.0
    %581 = vmatprep.subr.mxu0 0.0
    %582 = vmatpush1.msra.mxu0 0.0
    %583 = vmatprep.subr.mxu0 0.0
    %584 = vmatpush1.msra.mxu0 0.0
    %585 = vmatprep.subr.mxu0 0.0
    %586 = vmatpush1.msra.mxu0 0.0
    %587 = vmatprep.subr.mxu0 0.0
    %588 = vmatpush1.msra.mxu0 0.0
    %589 = vmatprep.subr.mxu0 0.0
    %590 = vmatpush1.msra.mxu0 0.0
    %591 = vmatprep.subr.mxu0 0.0
    %592 = vmatpush1.msra.mxu0 0.0
    %593 = vmatprep.subr.mxu0 0.0
    %594 = vmatpush1.msra.mxu0 0.0
    %595 = vmatprep.subr.mxu0 0.0
    %596 = vmatpush1.msra.mxu0 0.0
    %597 = vmatprep.subr.mxu0 0.0
    %598 = vmatpush1.msra.mxu0 0.0
    %599 = vmatprep.subr.mxu0 0.0
    %600 = vmatpush1.msra.mxu0 0.0
    %601 = vmatprep.subr.mxu0 0.0
    %602 = vmatpush1.msra.mxu0 0.0
    %603 = vmatprep.subr.mxu0 0.0
    %604 = vmatpush1.msra.mxu0 0.0
    %605 = vmatprep.subr.mxu0 0.0
    %606 = vmatpush1.msra.mxu0 0.0
    %607 = vmatprep.subr.mxu0 0.0
    %608 = vmatpush1.msra.mxu0 0.0
    %609 = vmatprep.subr.mxu0 0.0
    %610 = vmatpush1.msra.mxu0 0.0
    %611 = vmatprep.subr.mxu0 0.0
    %612 = vmatpush1.msra.mxu0 0.0
    %613 = vmatprep.subr.mxu0 0.0
    %614 = vmatpush1.msra.mxu0 0.0
    %615 = vmatprep.subr.mxu0 0.0
    %616 = vmatpush1.msra.mxu0 0.0
    %617 = vmatprep.subr.mxu0 0.0
    %618 = vmatpush1.msra.mxu0 0.0
    %619 = vmatprep.subr.mxu0 0.0
    %620 = vmatpush1.msra.mxu0 0.0
    %621 = vmatprep.subr.mxu0 0.0
    %622 = vmatpush1.msra.mxu0 0.0
    %623 = vmatprep.subr.mxu0 0.0
    %624 = vmatpush1.msra.mxu0 0.0
    %625 = vmatprep.mubr.f32.mxu0 0.0
    %626 = vmatmul.mubr.f32.gmra.mrb[0].mxu0 %v72
    %v627 = vpop.f32.mrb[0].mxu0
    %v628 = vadd.f32 0.0, %v627
    %v629 = vpop.f32.mrb[0].mxu0
    %630 = vmatprep.mubr.f32.mxu0 0.0
    %631 = vmatmul.mubr.f32.gmra.mrb[0].mxu0 %v75
    %v632 = vpop.f32.mrb[0].mxu0
    %v633 = vadd.f32 0.0, %v632
    %v634 = vpop.f32.mrb[0].mxu0
    %635 = vmatprep.mubr.f32.mxu0 0.0
    %636 = vmatmul.mubr.f32.gmra.mrb[0].mxu0 %v78
    %v637 = vpop.f32.mrb[0].mxu0
    %v638 = vadd.f32 0.0, %v637
    %v639 = vpop.f32.mrb[0].mxu0
    %640 = vmatprep.mubr.f32.mxu0 0.0
    %641 = vmatmul.mubr.f32.gmra.mrb[0].mxu0 %v81
    %v642 = vpop.f32.mrb[0].mxu0
    %v643 = vadd.f32 0.0, %v642
    %v644 = vpop.f32.mrb[0].mxu0
    %645 = vdwg.mxu0
    %650 = vrot.lane.b32.xlu0 %v557, 32
    %v651 = vpop.permute.xlu0 %650
    %652 = vrot.lane.b32.xlu0 %v558, 32
    %v653 = vpop.permute.xlu0 %652
    %654 = vrot.lane.b32.xlu0 %v559, 32
    %v655 = vpop.permute.xlu0 %654
    %656 = vrot.lane.b32.xlu0 %v560, 32
    %v657 = vpop.permute.xlu0 %656
    %v662 = vsel %vm70, %v628, %v651
    %v663 = vsel %vm70, %v633, %v653
    %v664 = vsel %vm70, %v638, %v655
    %v665 = vsel %vm70, %v643, %v657
    %v666 = vld [vmem:[%s6] sm:$0xff]
    %v667 = vld [vmem:[%s6 + $0x8] sm:$0xff]
    %v668 = vld [vmem:[%s6 + $0x10] sm:$0xff]
    %v669 = vld [vmem:[%s6 + $0x18] sm:$0xff]
    %v670 = vld [vmem:[%s6 + $0x20] sm:$0xff]
    %v671 = vld [vmem:[%s6 + $0x28] sm:$0xff]
    %v672 = vld [vmem:[%s6 + $0x30] sm:$0xff]
    %v673 = vld [vmem:[%s6 + $0x38] sm:$0xff]
    %v674 = vld [vmem:[#allocation2] sm:$0x1]
    %v676 = vlaneseq
    %v677 = vshrl.u32 %v676, 7
    %v678 = vsub.s32 0, %v677
    %v679 = vrot.slane %v674, %v678
    %v682 = vsel %vm439, %v662, 0
    %v685 = vsel %vm439, %v663, 0
    %v688 = vsel %vm439, %v664, 0
    %v691 = vsel %vm439, %v665, 0
    %693 = vmatprep.subr.mxu0 0.0
    %694 = vmatpush1.msra.mxu0 %v666
    %695 = vmatprep.subr.mxu0 0.0
    %696 = vmatpush1.msra.mxu0 %v667
    %697 = vmatprep.subr.mxu0 0.0
    %698 = vmatpush1.msra.mxu0 %v668
    %699 = vmatprep.subr.mxu0 0.0
    %700 = vmatpush1.msra.mxu0 %v669
    %701 = vmatprep.subr.mxu0 0.0
    %702 = vmatpush1.msra.mxu0 %v670
    %703 = vmatprep.subr.mxu0 0.0
    %704 = vmatpush1.msra.mxu0 %v671
    %705 = vmatprep.subr.mxu0 0.0
    %706 = vmatpush1.msra.mxu0 %v672
    %707 = vmatprep.subr.mxu0 0.0
    %708 = vmatpush1.msra.mxu0 %v673
    %709 = vmatprep.subr.mxu0 0.0
    %710 = vmatpush1.msra.mxu0 0.0
    %711 = vmatprep.subr.mxu0 0.0
    %712 = vmatpush1.msra.mxu0 0.0
    %713 = vmatprep.subr.mxu0 0.0
    %714 = vmatpush1.msra.mxu0 0.0
    %715 = vmatprep.subr.mxu0 0.0
    %716 = vmatpush1.msra.mxu0 0.0
    %717 = vmatprep.subr.mxu0 0.0
    %718 = vmatpush1.msra.mxu0 0.0
    %719 = vmatprep.subr.mxu0 0.0
    %720 = vmatpush1.msra.mxu0 0.0
    %721 = vmatprep.subr.mxu0 0.0
    %722 = vmatpush1.msra.mxu0 0.0
    %723 = vmatprep.subr.mxu0 0.0
    %724 = vmatpush1.msra.mxu0 0.0
    %725 = vmatprep.subr.mxu0 0.0
    %726 = vmatpush1.msra.mxu0 0.0
    %727 = vmatprep.subr.mxu0 0.0
    %728 = vmatpush1.msra.mxu0 0.0
    %729 = vmatprep.subr.mxu0 0.0
    %730 = vmatpush1.msra.mxu0 0.0
    %731 = vmatprep.subr.mxu0 0.0
    %732 = vmatpush1.msra.mxu0 0.0
    %733 = vmatprep.subr.mxu0 0.0
    %734 = vmatpush1.msra.mxu0 0.0
    %735 = vmatprep.subr.mxu0 0.0
    %736 = vmatpush1.msra.mxu0 0.0
    %737 = vmatprep.subr.mxu0 0.0
    %738 = vmatpush1.msra.mxu0 0.0
    %739 = vmatprep.subr.mxu0 0.0
    %740 = vmatpush1.msra.mxu0 0.0
    %741 = vmatprep.subr.mxu0 0.0
    %742 = vmatpush1.msra.mxu0 0.0
    %743 = vmatprep.subr.mxu0 0.0
    %744 = vmatpush1.msra.mxu0 0.0
    %745 = vmatprep.subr.mxu0 0.0
    %746 = vmatpush1.msra.mxu0 0.0
    %747 = vmatprep.subr.mxu0 0.0
    %748 = vmatpush1.msra.mxu0 0.0
    %749 = vmatprep.subr.mxu0 0.0
    %750 = vmatpush1.msra.mxu0 0.0
    %751 = vmatprep.subr.mxu0 0.0
    %752 = vmatpush1.msra.mxu0 0.0
    %753 = vmatprep.subr.mxu0 0.0
    %754 = vmatpush1.msra.mxu0 0.0
    %755 = vmatprep.subr.mxu0 0.0
    %756 = vmatpush1.msra.mxu0 0.0
    %757 = vmatprep.mubr.f32.mxu0 0.0
    %758 = vmatmul.mubr.f32.gmra.mrb[0].mxu0 %v682
    %v759 = vpop.f32.mrb[0].mxu0
    %v760 = vadd.f32 %v679, %v759
    %v761 = vpop.f32.mrb[0].mxu0
    %762 = vmatprep.mubr.f32.mxu0 0.0
    %763 = vmatmul.mubr.f32.gmra.mrb[0].mxu0 %v685
    %v764 = vpop.f32.mrb[0].mxu0
    %v765 = vadd.f32 %v679, %v764
    %v766 = vpop.f32.mrb[0].mxu0
    %767 = vmatprep.mubr.f32.mxu0 0.0
    %768 = vmatmul.mubr.f32.gmra.mrb[0].mxu0 %v688
    %v769 = vpop.f32.mrb[0].mxu0
    %v770 = vadd.f32 %v679, %v769
    %v771 = vpop.f32.mrb[0].mxu0
    %772 = vmatprep.mubr.f32.mxu0 0.0
    %773 = vmatmul.mubr.f32.gmra.mrb[0].mxu0 %v691
    %v774 = vpop.f32.mrb[0].mxu0
    %v775 = vadd.f32 %v679, %v774
    %v776 = vpop.f32.mrb[0].mxu0
    %777 = vdwg.mxu0
    %vm778 = vcmp.gt.f32.partialorder %v760, 0.0
    %vm779 = vcmp.gt.f32.partialorder %v765, 0.0
    %vm780 = vcmp.gt.f32.partialorder %v770, 0.0
    %vm781 = vcmp.gt.f32.partialorder %v775, 0.0
    %v782 = vmin.f32 %v760, 0.0
    %v783 = vmin.f32 %v765, 0.0
    %v784 = vmin.f32 %v770, 0.0
    %v785 = vmin.f32 %v775, 0.0
    %v786 = vmul.f32 %v782, 1.442695
    %v787 = vpow.pop %v786
    %v788 = vmul.f32 %v783, 1.442695
    %v789 = vpow.pop %v788
    %v790 = vmul.f32 %v784, 1.442695
    %v791 = vpow.pop %v790
    %v792 = vmul.f32 %v785, 1.442695
    %v793 = vpow.pop %v792
    %v794 = vsub.f32 %v787, 1.0
    %v795 = vsub.f32 %v789, 1.0
    %v796 = vsub.f32 %v791, 1.0
    %v797 = vsub.f32 %v793, 1.0
    %v798 = vsel %vm778, %v760, %v794
    %v799 = vsel %vm779, %v765, %v795
    %v800 = vsel %vm780, %v770, %v796
    %v801 = vsel %vm781, %v775, %v797
    %v802 = vld [vmem:[%s8] sm:$0xff]
    %v803 = vld [vmem:[%s8 + $0x8] sm:$0xff]
    %v804 = vld [vmem:[%s8 + $0x10] sm:$0xff]
    %v805 = vld [vmem:[%s8 + $0x18] sm:$0xff]
    %v806 = vld [vmem:[%s9] sm:$0xff]
    %v807 = vld [vmem:[%s9 + $0x8] sm:$0xff]
    %v808 = vld [vmem:[%s9 + $0x10] sm:$0xff]
    %v809 = vld [vmem:[%s9 + $0x18] sm:$0xff]
    %v810 = vsel %vm70, %v557, 0
    %v812 = vsel %vm70, %v558, 0
    %v814 = vsel %vm70, %v559, 0
    %v816 = vsel %vm70, %v560, 0
    %818 = vmatprep.subr.mxu0 0.0
    %819 = vmatpush1.msra.mxu0 %v806
    %820 = vmatprep.subr.mxu0 0.0
    %821 = vmatpush1.msra.mxu0 %v807
    %822 = vmatprep.subr.mxu0 0.0
    %823 = vmatpush1.msra.mxu0 %v808
    %824 = vmatprep.subr.mxu0 0.0
    %825 = vmatpush1.msra.mxu0 %v809
    %826 = vmatprep.subr.mxu0 0.0
    %827 = vmatpush1.msra.mxu0 0.0
    %828 = vmatprep.subr.mxu0 0.0
    %829 = vmatpush1.msra.mxu0 0.0
    %830 = vmatprep.subr.mxu0 0.0
    %831 = vmatpush1.msra.mxu0 0.0
    %832 = vmatprep.subr.mxu0 0.0
    %833 = vmatpush1.msra.mxu0 0.0
    %834 = vmatprep.subr.mxu0 0.0
    %835 = vmatpush1.msra.mxu0 0.0
    %836 = vmatprep.subr.mxu0 0.0
    %837 = vmatpush1.msra.mxu0 0.0
    %838 = vmatprep.subr.mxu0 0.0
    %839 = vmatpush1.msra.mxu0 0.0
    %840 = vmatprep.subr.mxu0 0.0
    %841 = vmatpush1.msra.mxu0 0.0
    %842 = vmatprep.subr.mxu0 0.0
    %843 = vmatpush1.msra.mxu0 0.0
    %844 = vmatprep.subr.mxu0 0.0
    %845 = vmatpush1.msra.mxu0 0.0
    %846 = vmatprep.subr.mxu0 0.0
    %847 = vmatpush1.msra.mxu0 0.0
    %848 = vmatprep.subr.mxu0 0.0
    %849 = vmatpush1.msra.mxu0 0.0
    %850 = vmatprep.subr.mxu0 0.0
    %851 = vmatpush1.msra.mxu0 0.0
    %852 = vmatprep.subr.mxu0 0.0
    %853 = vmatpush1.msra.mxu0 0.0
    %854 = vmatprep.subr.mxu0 0.0
    %855 = vmatpush1.msra.mxu0 0.0
    %856 = vmatprep.subr.mxu0 0.0
    %857 = vmatpush1.msra.mxu0 0.0
    %858 = vmatprep.subr.mxu0 0.0
    %859 = vmatpush1.msra.mxu0 0.0
    %860 = vmatprep.subr.mxu0 0.0
    %861 = vmatpush1.msra.mxu0 0.0
    %862 = vmatprep.subr.mxu0 0.0
    %863 = vmatpush1.msra.mxu0 0.0
    %864 = vmatprep.subr.mxu0 0.0
    %865 = vmatpush1.msra.mxu0 0.0
    %866 = vmatprep.subr.mxu0 0.0
    %867 = vmatpush1.msra.mxu0 0.0
    %868 = vmatprep.subr.mxu0 0.0
    %869 = vmatpush1.msra.mxu0 0.0
    %870 = vmatprep.subr.mxu0 0.0
    %871 = vmatpush1.msra.mxu0 0.0
    %872 = vmatprep.subr.mxu0 0.0
    %873 = vmatpush1.msra.mxu0 0.0
    %874 = vmatprep.subr.mxu0 0.0
    %875 = vmatpush1.msra.mxu0 0.0
    %876 = vmatprep.subr.mxu0 0.0
    %877 = vmatpush1.msra.mxu0 0.0
    %878 = vmatprep.subr.mxu0 0.0
    %879 = vmatpush1.msra.mxu0 0.0
    %880 = vmatprep.subr.mxu0 0.0
    %881 = vmatpush1.msra.mxu0 0.0
    %882 = vmatprep.mubr.f32.mxu0 0.0
    %883 = vmatmul.mubr.f32.gmra.mrb[0].mxu0 %v810
    %v884 = vpop.f32.mrb[0].mxu0
    %v885 = vadd.f32 0.0, %v884
    %v886 = vpop.f32.mrb[0].mxu0
    %887 = vmatprep.mubr.f32.mxu0 0.0
    %888 = vmatmul.mubr.f32.gmra.mrb[0].mxu0 %v812
    %v889 = vpop.f32.mrb[0].mxu0
    %v890 = vadd.f32 0.0, %v889
    %v891 = vpop.f32.mrb[0].mxu0
    %892 = vmatprep.mubr.f32.mxu0 0.0
    %893 = vmatmul.mubr.f32.gmra.mrb[0].mxu0 %v814
    %v894 = vpop.f32.mrb[0].mxu0
    %v895 = vadd.f32 0.0, %v894
    %v896 = vpop.f32.mrb[0].mxu0
    %897 = vmatprep.mubr.f32.mxu0 0.0
    %898 = vmatmul.mubr.f32.gmra.mrb[0].mxu0 %v816
    %v899 = vpop.f32.mrb[0].mxu0
    %v900 = vadd.f32 0.0, %v899
    %v901 = vpop.f32.mrb[0].mxu0
    %902 = vdwg.mxu0
    %v903 = vsel %vm70, %v315, 0
    %v905 = vsel %vm70, %v316, 0
    %v907 = vsel %vm70, %v317, 0
    %v909 = vsel %vm70, %v318, 0
    %911 = vmatprep.subr.mxu0 0.0
    %912 = vmatpush1.msra.mxu0 %v802
    %913 = vmatprep.subr.mxu0 0.0
    %914 = vmatpush1.msra.mxu0 %v803
    %915 = vmatprep.subr.mxu0 0.0
    %916 = vmatpush1.msra.mxu0 %v804
    %917 = vmatprep.subr.mxu0 0.0
    %918 = vmatpush1.msra.mxu0 %v805
    %919 = vmatprep.subr.mxu0 0.0
    %920 = vmatpush1.msra.mxu0 0.0
    %921 = vmatprep.subr.mxu0 0.0
    %922 = vmatpush1.msra.mxu0 0.0
    %923 = vmatprep.subr.mxu0 0.0
    %924 = vmatpush1.msra.mxu0 0.0
    %925 = vmatprep.subr.mxu0 0.0
    %926 = vmatpush1.msra.mxu0 0.0
    %927 = vmatprep.subr.mxu0 0.0
    %928 = vmatpush1.msra.mxu0 0.0
    %929 = vmatprep.subr.mxu0 0.0
    %930 = vmatpush1.msra.mxu0 0.0
    %931 = vmatprep.subr.mxu0 0.0
    %932 = vmatpush1.msra.mxu0 0.0
    %933 = vmatprep.subr.mxu0 0.0
    %934 = vmatpush1.msra.mxu0 0.0
    %935 = vmatprep.subr.mxu0 0.0
    %936 = vmatpush1.msra.mxu0 0.0
    %937 = vmatprep.subr.mxu0 0.0
    %938 = vmatpush1.msra.mxu0 0.0
    %939 = vmatprep.subr.mxu0 0.0
    %940 = vmatpush1.msra.mxu0 0.0
    %941 = vmatprep.subr.mxu0 0.0
    %942 = vmatpush1.msra.mxu0 0.0
    %943 = vmatprep.subr.mxu0 0.0
    %944 = vmatpush1.msra.mxu0 0.0
    %945 = vmatprep.subr.mxu0 0.0
    %946 = vmatpush1.msra.mxu0 0.0
    %947 = vmatprep.subr.mxu0 0.0
    %948 = vmatpush1.msra.mxu0 0.0
    %949 = vmatprep.subr.mxu0 0.0
    %950 = vmatpush1.msra.mxu0 0.0
    %951 = vmatprep.subr.mxu0 0.0
    %952 = vmatpush1.msra.mxu0 0.0
    %953 = vmatprep.subr.mxu0 0.0
    %954 = vmatpush1.msra.mxu0 0.0
    %955 = vmatprep.subr.mxu0 0.0
    %956 = vmatpush1.msra.mxu0 0.0
    %957 = vmatprep.subr.mxu0 0.0
    %958 = vmatpush1.msra.mxu0 0.0
    %959 = vmatprep.subr.mxu0 0.0
    %960 = vmatpush1.msra.mxu0 0.0
    %961 = vmatprep.subr.mxu0 0.0
    %962 = vmatpush1.msra.mxu0 0.0
    %963 = vmatprep.subr.mxu0 0.0
    %964 = vmatpush1.msra.mxu0 0.0
    %965 = vmatprep.subr.mxu0 0.0
    %966 = vmatpush1.msra.mxu0 0.0
    %967 = vmatprep.subr.mxu0 0.0
    %968 = vmatpush1.msra.mxu0 0.0
    %969 = vmatprep.subr.mxu0 0.0
    %970 = vmatpush1.msra.mxu0 0.0
    %971 = vmatprep.subr.mxu0 0.0
    %972 = vmatpush1.msra.mxu0 0.0
    %973 = vmatprep.subr.mxu0 0.0
    %974 = vmatpush1.msra.mxu0 0.0
    %975 = vmatprep.mubr.f32.mxu0 0.0
    %976 = vmatmul.mubr.f32.gmra.mrb[0].mxu0 %v903
    %v977 = vpop.f32.mrb[0].mxu0
    %v978 = vadd.f32 %v885, %v977
    %v979 = vpop.f32.mrb[0].mxu0
    %980 = vmatprep.mubr.f32.mxu0 0.0
    %981 = vmatmul.mubr.f32.gmra.mrb[0].mxu0 %v905
    %v982 = vpop.f32.mrb[0].mxu0
    %v983 = vadd.f32 %v890, %v982
    %v984 = vpop.f32.mrb[0].mxu0
    %985 = vmatprep.mubr.f32.mxu0 0.0
    %986 = vmatmul.mubr.f32.gmra.mrb[0].mxu0 %v907
    %v987 = vpop.f32.mrb[0].mxu0
    %v988 = vadd.f32 %v895, %v987
    %v989 = vpop.f32.mrb[0].mxu0
    %990 = vmatprep.mubr.f32.mxu0 0.0
    %991 = vmatmul.mubr.f32.gmra.mrb[0].mxu0 %v909
    %v992 = vpop.f32.mrb[0].mxu0
    %v993 = vadd.f32 %v900, %v992
    %v994 = vpop.f32.mrb[0].mxu0
    %995 = vdwg.mxu0
    %v996 = vld [vmem:[%s10] sm:$0x1]
    %998 = vset.pattern.permute.xlu0 0
    %999 = vperm.xlu0 %998, %v798
    %v1000 = vpop.permute.xlu0 %999
    %1003 = vset.pattern.permute.xlu0 0
    %1004 = vperm.xlu0 %1003, %v799
    %v1005 = vpop.permute.xlu0 %1004
    %1008 = vset.pattern.permute.xlu0 0
    %1009 = vperm.xlu0 %1008, %v800
    %v1010 = vpop.permute.xlu0 %1009
    %1013 = vset.pattern.permute.xlu0 0
    %1014 = vperm.xlu0 %1013, %v801
    %v1015 = vpop.permute.xlu0 %1014
    %v1018 = vlaneseq
    %v1019 = vshrl.u32 %v1018, 7
    %v1020 = vsub.s32 0, %v1019
    %v1021 = vrot.slane %v996, %v1020
    %v1023 = vmul.f32 %v1000, %v1021
    %v1024 = vmul.f32 %v1005, %v1021
    %v1025 = vmul.f32 %v1010, %v1021
    %v1026 = vmul.f32 %v1015, %v1021
    %v1027 = vadd.f32 %v978, %v1023
    %v1028 = vadd.f32 %v983, %v1024
    %v1029 = vadd.f32 %v988, %v1025
    %v1030 = vadd.f32 %v993, %v1026
    %v1031 = vld [vmem:[%s11] sm:$0x1]
    %v1033 = vlaneseq
    %v1034 = vshrl.u32 %v1033, 7
    %v1035 = vsub.s32 0, %v1034
    %v1036 = vrot.slane %v1031, %v1035
    %v1038 = vadd.f32 %v1027, %v1036
    %v1039 = vadd.f32 %v1028, %v1036
    %v1040 = vadd.f32 %v1029, %v1036
    %v1041 = vadd.f32 %v1030, %v1036
    %v1042 = vlaneseq
    %v1043 = vshrl.u32 %v1042, 7
    %v1044 = vadd.s32 %v1043, 8
    %v1045 = vadd.s32 %v1043, 16
    %v1046 = vadd.s32 %v1043, 24
    %v1047 = vlaneseq
    %v1048 = vand.u32 %v1047, 127
    %vm1049 = vcmp.eq.s32.totalorder %v1043, %v1048
    %vm1050 = vcmp.eq.s32.totalorder %v1044, %v1048
    %vm1051 = vcmp.eq.s32.totalorder %v1045, %v1048
    %vm1052 = vcmp.eq.s32.totalorder %v1046, %v1048
    %v1053 = vsel %vm1049, 1.0, 0.0
    %v1054 = vsel %vm1050, 1.0, 0.0
    %v1055 = vsel %vm1051, 1.0, 0.0
    %v1056 = vsel %vm1052, 1.0, 0.0
    %v1057 = vmul.f32 %v1053, %v1000
    %v1058 = vmul.f32 %v1054, %v1005
    %v1059 = vmul.f32 %v1055, %v1010
    %v1060 = vmul.f32 %v1056, %v1015
    %v1062 = vsel %vm70, 1.0, 0
    %1064 = vmatprep.subr.mxu0 0.0
    %1065 = vmatpush1.msra.mxu0 %v1057
    %1066 = vmatprep.subr.mxu0 0.0
    %1067 = vmatpush1.msra.mxu0 %v1058
    %1068 = vmatprep.subr.mxu0 0.0
    %1069 = vmatpush1.msra.mxu0 %v1059
    %1070 = vmatprep.subr.mxu0 0.0
    %1071 = vmatpush1.msra.mxu0 %v1060
    %1072 = vmatprep.subr.mxu0 0.0
    %1073 = vmatpush1.msra.mxu0 0.0
    %1074 = vmatprep.subr.mxu0 0.0
    %1075 = vmatpush1.msra.mxu0 0.0
    %1076 = vmatprep.subr.mxu0 0.0
    %1077 = vmatpush1.msra.mxu0 0.0
    %1078 = vmatprep.subr.mxu0 0.0
    %1079 = vmatpush1.msra.mxu0 0.0
    %1080 = vmatprep.subr.mxu0 0.0
    %1081 = vmatpush1.msra.mxu0 0.0
    %1082 = vmatprep.subr.mxu0 0.0
    %1083 = vmatpush1.msra.mxu0 0.0
    %1084 = vmatprep.subr.mxu0 0.0
    %1085 = vmatpush1.msra.mxu0 0.0
    %1086 = vmatprep.subr.mxu0 0.0
    %1087 = vmatpush1.msra.mxu0 0.0
    %1088 = vmatprep.subr.mxu0 0.0
    %1089 = vmatpush1.msra.mxu0 0.0
    %1090 = vmatprep.subr.mxu0 0.0
    %1091 = vmatpush1.msra.mxu0 0.0
    %1092 = vmatprep.subr.mxu0 0.0
    %1093 = vmatpush1.msra.mxu0 0.0
    %1094 = vmatprep.subr.mxu0 0.0
    %1095 = vmatpush1.msra.mxu0 0.0
    %1096 = vmatprep.subr.mxu0 0.0
    %1097 = vmatpush1.msra.mxu0 0.0
    %1098 = vmatprep.subr.mxu0 0.0
    %1099 = vmatpush1.msra.mxu0 0.0
    %1100 = vmatprep.subr.mxu0 0.0
    %1101 = vmatpush1.msra.mxu0 0.0
    %1102 = vmatprep.subr.mxu0 0.0
    %1103 = vmatpush1.msra.mxu0 0.0
    %1104 = vmatprep.subr.mxu0 0.0
    %1105 = vmatpush1.msra.mxu0 0.0
    %1106 = vmatprep.subr.mxu0 0.0
    %1107 = vmatpush1.msra.mxu0 0.0
    %1108 = vmatprep.subr.mxu0 0.0
    %1109 = vmatpush1.msra.mxu0 0.0
    %1110 = vmatprep.subr.mxu0 0.0
    %1111 = vmatpush1.msra.mxu0 0.0
    %1112 = vmatprep.subr.mxu0 0.0
    %1113 = vmatpush1.msra.mxu0 0.0
    %1114 = vmatprep.subr.mxu0 0.0
    %1115 = vmatpush1.msra.mxu0 0.0
    %1116 = vmatprep.subr.mxu0 0.0
    %1117 = vmatpush1.msra.mxu0 0.0
    %1118 = vmatprep.subr.mxu0 0.0
    %1119 = vmatpush1.msra.mxu0 0.0
    %1120 = vmatprep.subr.mxu0 0.0
    %1121 = vmatpush1.msra.mxu0 0.0
    %1122 = vmatprep.subr.mxu0 0.0
    %1123 = vmatpush1.msra.mxu0 0.0
    %1124 = vmatprep.subr.mxu0 0.0
    %1125 = vmatpush1.msra.mxu0 0.0
    %1126 = vmatprep.subr.mxu0 0.0
    %1127 = vmatpush1.msra.mxu0 0.0
    %1128 = vmatprep.mubr.f32.mxu0 0.0
    %1129 = vmatmul.mubr.f32.gmra.mrb[0].mxu0 %v1062
    %v1130 = vpop.f32.mrb[0].mxu0
    %v1131 = vadd.f32 0.0, %v1130
    %v1132 = vpop.f32.mrb[0].mxu0
    %1133 = vdwg.mxu0
    %vm1134 = vcmp.ge.s32.totalorder %v1043, 0
    %vm1135 = vcmp.ge.s32.totalorder %v1044, 0
    %vm1136 = vcmp.ge.s32.totalorder %v1045, 0
    %vm1137 = vcmp.ge.s32.totalorder %v1046, 0
    %vm1138 = vcmp.lt.s32.totalorder %v1043, 16
    %vm1139 = vcmp.lt.s32.totalorder %v1044, 16
    %vm1140 = vcmp.lt.s32.totalorder %v1045, 16
    %vm1141 = vcmp.lt.s32.totalorder %v1046, 16
    %vm1142 = vmand %vm1134, %vm1138
    %vm1143 = vmand %vm1135, %vm1139
    %vm1144 = vmand %vm1136, %vm1140
    %vm1145 = vmand %vm1137, %vm1141
    %vm1146 = vcmp.ge.s32.totalorder %v1048, 0
    %vm1147 = vcmp.lt.s32.totalorder %v1048, 16
    %vm1148 = vmand %vm1146, %vm1147
    %vm1149 = vmand %vm1142, %vm1148
    %vm1150 = vmand %vm1143, %vm1148
    %vm1151 = vmand %vm1144, %vm1148
    %vm1152 = vmand %vm1145, %vm1148
    %vm1153 = vcmp.ge.s32.totalorder %v1043, 16
    %vm1154 = vcmp.ge.s32.totalorder %v1044, 16
    %vm1155 = vcmp.ge.s32.totalorder %v1045, 16
    %vm1156 = vcmp.ge.s32.totalorder %v1046, 16
    %vm1157 = vcmp.lt.s32.totalorder %v1043, 32
    %vm1158 = vcmp.lt.s32.totalorder %v1044, 32
    %vm1159 = vcmp.lt.s32.totalorder %v1045, 32
    %vm1160 = vcmp.lt.s32.totalorder %v1046, 32
    %vm1161 = vmand %vm1153, %vm1157
    %vm1162 = vmand %vm1154, %vm1158
    %vm1163 = vmand %vm1155, %vm1159
    %vm1164 = vmand %vm1156, %vm1160
    %vm1165 = vcmp.ge.s32.totalorder %v1048, 16
    %vm1166 = vcmp.lt.s32.totalorder %v1048, 32
    %vm1167 = vmand %vm1165, %vm1166
    %vm1168 = vmand %vm1161, %vm1167
    %vm1169 = vmand %vm1162, %vm1167
    %vm1170 = vmand %vm1163, %vm1167
    %vm1171 = vmand %vm1164, %vm1167
    %v1172 = vsel %vm1167, 16.0, 0.0
    %v1173 = vadd.f32 %v1172, 0.0
    %vm1174 = vmor %vm1149, %vm1168
    %vm1175 = vmor %vm1150, %vm1169
    %vm1176 = vmor %vm1151, %vm1170
    %vm1177 = vmor %vm1152, %vm1171
    %v1178 = vlaneseq
    %v1179 = vshrl.u32 %v1178, 7
    %v1180 = vsub.s32 0, %v1179
    %v1181 = vrot.slane %v1131, %v1180
    %vm1182 = vcmp.gt.f32.partialorder %v1000, %v1181
    %vm1183 = vcmp.gt.f32.partialorder %v1005, %v1181
    %vm1184 = vcmp.gt.f32.partialorder %v1010, %v1181
    %vm1185 = vcmp.gt.f32.partialorder %v1015, %v1181
    %vm1186 = vcmp.eq.f32.partialorder %v1000, %v1181
    %vm1187 = vcmp.eq.f32.partialorder %v1005, %v1181
    %vm1188 = vcmp.eq.f32.partialorder %v1010, %v1181
    %vm1189 = vcmp.eq.f32.partialorder %v1015, %v1181
    %vm1190 = vcmp.lt.s32.totalorder %v1043, %v1048
    %vm1191 = vcmp.lt.s32.totalorder %v1044, %v1048
    %vm1192 = vcmp.lt.s32.totalorder %v1045, %v1048
    %vm1193 = vcmp.lt.s32.totalorder %v1046, %v1048
    %vm1194 = vmand %vm1186, %vm1190
    %vm1195 = vmand %vm1187, %vm1191
    %vm1196 = vmand %vm1188, %vm1192
    %vm1197 = vmand %vm1189, %vm1193
    %vm1198 = vmor %vm1182, %vm1194
    %vm1199 = vmor %vm1183, %vm1195
    %vm1200 = vmor %vm1184, %vm1196
    %vm1201 = vmor %vm1185, %vm1197
    %vm1202 = vmand %vm1174, %vm1198
    %vm1203 = vmand %vm1175, %vm1199
    %vm1204 = vmand %vm1176, %vm1200
    %vm1205 = vmand %vm1177, %vm1201
    %v1206 = vsel %vm1202, 1.0, 0.0
    %v1207 = vsel %vm1203, 1.0, 0.0
    %v1208 = vsel %vm1204, 1.0, 0.0
    %v1209 = vsel %vm1205, 1.0, 0.0
    %1210 = vmatprep.subr.mxu0 0.0
    %1211 = vmatpush1.msra.mxu0 %v1206
    %1212 = vmatprep.subr.mxu0 0.0
    %1213 = vmatpush1.msra.mxu0 %v1207
    %1214 = vmatprep.subr.mxu0 0.0
    %1215 = vmatpush1.msra.mxu0 %v1208
    %1216 = vmatprep.subr.mxu0 0.0
    %1217 = vmatpush1.msra.mxu0 %v1209
    %1218 = vmatprep.subr.mxu0 0.0
    %1219 = vmatpush1.msra.mxu0 0.0
    %1220 = vmatprep.subr.mxu0 0.0
    %1221 = vmatpush1.msra.mxu0 0.0
    %1222 = vmatprep.subr.mxu0 0.0
    %1223 = vmatpush1.msra.mxu0 0.0
    %1224 = vmatprep.subr.mxu0 0.0
    %1225 = vmatpush1.msra.mxu0 0.0
    %1226 = vmatprep.subr.mxu0 0.0
    %1227 = vmatpush1.msra.mxu0 0.0
    %1228 = vmatprep.subr.mxu0 0.0
    %1229 = vmatpush1.msra.mxu0 0.0
    %1230 = vmatprep.subr.mxu0 0.0
    %1231 = vmatpush1.msra.mxu0 0.0
    %1232 = vmatprep.subr.mxu0 0.0
    %1233 = vmatpush1.msra.mxu0 0.0
    %1234 = vmatprep.subr.mxu0 0.0
    %1235 = vmatpush1.msra.mxu0 0.0
    %1236 = vmatprep.subr.mxu0 0.0
    %1237 = vmatpush1.msra.mxu0 0.0
    %1238 = vmatprep.subr.mxu0 0.0
    %1239 = vmatpush1.msra.mxu0 0.0
    %1240 = vmatprep.subr.mxu0 0.0
    %1241 = vmatpush1.msra.mxu0 0.0
    %1242 = vmatprep.subr.mxu0 0.0
    %1243 = vmatpush1.msra.mxu0 0.0
    %1244 = vmatprep.subr.mxu0 0.0
    %1245 = vmatpush1.msra.mxu0 0.0
    %1246 = vmatprep.subr.mxu0 0.0
    %1247 = vmatpush1.msra.mxu0 0.0
    %1248 = vmatprep.subr.mxu0 0.0
    %1249 = vmatpush1.msra.mxu0 0.0
    %1250 = vmatprep.subr.mxu0 0.0
    %1251 = vmatpush1.msra.mxu0 0.0
    %1252 = vmatprep.subr.mxu0 0.0
    %1253 = vmatpush1.msra.mxu0 0.0
    %1254 = vmatprep.subr.mxu0 0.0
    %1255 = vmatpush1.msra.mxu0 0.0
    %1256 = vmatprep.subr.mxu0 0.0
    %1257 = vmatpush1.msra.mxu0 0.0
    %1258 = vmatprep.subr.mxu0 0.0
    %1259 = vmatpush1.msra.mxu0 0.0
    %1260 = vmatprep.subr.mxu0 0.0
    %1261 = vmatpush1.msra.mxu0 0.0
    %1262 = vmatprep.subr.mxu0 0.0
    %1263 = vmatpush1.msra.mxu0 0.0
    %1264 = vmatprep.subr.mxu0 0.0
    %1265 = vmatpush1.msra.mxu0 0.0
    %1266 = vmatprep.subr.mxu0 0.0
    %1267 = vmatpush1.msra.mxu0 0.0
    %1268 = vmatprep.subr.mxu0 0.0
    %1269 = vmatpush1.msra.mxu0 0.0
    %1270 = vmatprep.subr.mxu0 0.0
    %1271 = vmatpush1.msra.mxu0 0.0
    %1272 = vmatprep.subr.mxu0 0.0
    %1273 = vmatpush1.msra.mxu0 0.0
    %1274 = vmatprep.mubr.f32.mxu0 0.0
    %1275 = vmatmul.mubr.f32.gmra.mrb[0].mxu0 %v1062
    %v1276 = vpop.f32.mrb[0].mxu0
    %v1277 = vadd.f32 0.0, %v1276
    %v1278 = vpop.f32.mrb[0].mxu0
    %1279 = vdwg.mxu0
    %v1280 = vadd.f32 %v1173, %v1277
    %v1281 = vcvt.s32.f32 %v1043
    %v1282 = vcvt.s32.f32 %v1044
    %v1283 = vcvt.s32.f32 %v1045
    %v1284 = vcvt.s32.f32 %v1046
    %v1285 = vlaneseq
    %v1286 = vshrl.u32 %v1285, 7
    %v1287 = vsub.s32 0, %v1286
    %v1288 = vrot.slane %v1280, %v1287
    %vm1289 = vcmp.eq.f32.partialorder %v1281, %v1288
    %vm1290 = vcmp.eq.f32.partialorder %v1282, %v1288
    %vm1291 = vcmp.eq.f32.partialorder %v1283, %v1288
    %vm1292 = vcmp.eq.f32.partialorder %v1284, %v1288
    %v1293 = vsel %vm1289, 1.0, 0.0
    %v1294 = vsel %vm1290, 1.0, 0.0
    %v1295 = vsel %vm1291, 1.0, 0.0
    %v1296 = vsel %vm1292, 1.0, 0.0
    %v1298 = vsel %vm70, %v1293, 0
    %v1301 = vsel %vm70, %v1294, 0
    %v1304 = vsel %vm70, %v1295, 0
    %v1307 = vsel %vm70, %v1296, 0
    %1309 = vmatprep.subr.mxu0 0.0
    %1310 = vmatpush1.msra.mxu0 %v1038
    %1311 = vmatprep.subr.mxu0 0.0
    %1312 = vmatpush1.msra.mxu0 %v1039
    %1313 = vmatprep.subr.mxu0 0.0
    %1314 = vmatpush1.msra.mxu0 %v1040
    %1315 = vmatprep.subr.mxu0 0.0
    %1316 = vmatpush1.msra.mxu0 %v1041
    %1317 = vmatprep.subr.mxu0 0.0
    %1318 = vmatpush1.msra.mxu0 0.0
    %1319 = vmatprep.subr.mxu0 0.0
    %1320 = vmatpush1.msra.mxu0 0.0
    %1321 = vmatprep.subr.mxu0 0.0
    %1322 = vmatpush1.msra.mxu0 0.0
    %1323 = vmatprep.subr.mxu0 0.0
    %1324 = vmatpush1.msra.mxu0 0.0
    %1325 = vmatprep.subr.mxu0 0.0
    %1326 = vmatpush1.msra.mxu0 0.0
    %1327 = vmatprep.subr.mxu0 0.0
    %1328 = vmatpush1.msra.mxu0 0.0
    %1329 = vmatprep.subr.mxu0 0.0
    %1330 = vmatpush1.msra.mxu0 0.0
    %1331 = vmatprep.subr.mxu0 0.0
    %1332 = vmatpush1.msra.mxu0 0.0
    %1333 = vmatprep.subr.mxu0 0.0
    %1334 = vmatpush1.msra.mxu0 0.0
    %1335 = vmatprep.subr.mxu0 0.0
    %1336 = vmatpush1.msra.mxu0 0.0
    %1337 = vmatprep.subr.mxu0 0.0
    %1338 = vmatpush1.msra.mxu0 0.0
    %1339 = vmatprep.subr.mxu0 0.0
    %1340 = vmatpush1.msra.mxu0 0.0
    %1341 = vmatprep.subr.mxu0 0.0
    %1342 = vmatpush1.msra.mxu0 0.0
    %1343 = vmatprep.subr.mxu0 0.0
    %1344 = vmatpush1.msra.mxu0 0.0
    %1345 = vmatprep.subr.mxu0 0.0
    %1346 = vmatpush1.msra.mxu0 0.0
    %1347 = vmatprep.subr.mxu0 0.0
    %1348 = vmatpush1.msra.mxu0 0.0
    %1349 = vmatprep.subr.mxu0 0.0
    %1350 = vmatpush1.msra.mxu0 0.0
    %1351 = vmatprep.subr.mxu0 0.0
    %1352 = vmatpush1.msra.mxu0 0.0
    %1353 = vmatprep.subr.mxu0 0.0
    %1354 = vmatpush1.msra.mxu0 0.0
    %1355 = vmatprep.subr.mxu0 0.0
    %1356 = vmatpush1.msra.mxu0 0.0
    %1357 = vmatprep.subr.mxu0 0.0
    %1358 = vmatpush1.msra.mxu0 0.0
    %1359 = vmatprep.subr.mxu0 0.0
    %1360 = vmatpush1.msra.mxu0 0.0
    %1361 = vmatprep.subr.mxu0 0.0
    %1362 = vmatpush1.msra.mxu0 0.0
    %1363 = vmatprep.subr.mxu0 0.0
    %1364 = vmatpush1.msra.mxu0 0.0
    %1365 = vmatprep.subr.mxu0 0.0
    %1366 = vmatpush1.msra.mxu0 0.0
    %1367 = vmatprep.subr.mxu0 0.0
    %1368 = vmatpush1.msra.mxu0 0.0
    %1369 = vmatprep.subr.mxu0 0.0
    %1370 = vmatpush1.msra.mxu0 0.0
    %1371 = vmatprep.subr.mxu0 0.0
    %1372 = vmatpush1.msra.mxu0 0.0
    %1373 = vmatprep.mubr.f32.mxu0 0.0
    %1374 = vmatmul.mubr.f32.gmra.mrb[0].mxu0 %v1298
    %v1375 = vpop.f32.mrb[0].mxu0
    %v1376 = vadd.f32 0.0, %v1375
    %v1377 = vpop.f32.mrb[0].mxu0
    %1378 = vmatprep.mubr.f32.mxu0 0.0
    %1379 = vmatmul.mubr.f32.gmra.mrb[0].mxu0 %v1301
    %v1380 = vpop.f32.mrb[0].mxu0
    %v1381 = vadd.f32 0.0, %v1380
    %v1382 = vpop.f32.mrb[0].mxu0
    %1383 = vmatprep.mubr.f32.mxu0 0.0
    %1384 = vmatmul.mubr.f32.gmra.mrb[0].mxu0 %v1304
    %v1385 = vpop.f32.mrb[0].mxu0
    %v1386 = vadd.f32 0.0, %v1385
    %v1387 = vpop.f32.mrb[0].mxu0
    %1388 = vmatprep.mubr.f32.mxu0 0.0
    %1389 = vmatmul.mubr.f32.gmra.mrb[0].mxu0 %v1307
    %v1390 = vpop.f32.mrb[0].mxu0
    %v1391 = vadd.f32 0.0, %v1390
    %v1392 = vpop.f32.mrb[0].mxu0
    %1393 = vdwg.mxu0
    %vm1394 = vcmp.gt.f32.partialorder %v1376, 0.0
    %vm1395 = vcmp.gt.f32.partialorder %v1381, 0.0
    %vm1396 = vcmp.gt.f32.partialorder %v1386, 0.0
    %vm1397 = vcmp.gt.f32.partialorder %v1391, 0.0
    %v1398 = vmin.f32 %v1376, 0.0
    %v1399 = vmin.f32 %v1381, 0.0
    %v1400 = vmin.f32 %v1386, 0.0
    %v1401 = vmin.f32 %v1391, 0.0
    %v1402 = vmul.f32 %v1398, 1.442695
    %v1403 = vpow.pop %v1402
    %v1404 = vmul.f32 %v1399, 1.442695
    %v1405 = vpow.pop %v1404
    %v1406 = vmul.f32 %v1400, 1.442695
    %v1407 = vpow.pop %v1406
    %v1408 = vmul.f32 %v1401, 1.442695
    %v1409 = vpow.pop %v1408
    %v1410 = vsub.f32 %v1403, 1.0
    %v1411 = vsub.f32 %v1405, 1.0
    %v1412 = vsub.f32 %v1407, 1.0
    %v1413 = vsub.f32 %v1409, 1.0
    %v1414 = vsel %vm1394, %v1376, %v1410
    %v1415 = vsel %vm1395, %v1381, %v1411
    %v1416 = vsel %vm1396, %v1386, %v1412
    %v1417 = vsel %vm1397, %v1391, %v1413
    %v1422 = vcombine.high %v1414, %v1414
    %v1424 = vunpack.c.l.s4 1983009808
    %v1425 = vunpack.c.0.s8 %v1424
    %v1426 = vlaneseq
    %v1427 = vshrl.u32 %v1426, 7
    %v1428 = vsub.s32 %v1425, %v1427
    %v1429 = vrot.slane %v1414, %v1428
    %v1431 = vunpack.c.l.s4 1983009808
    %v1432 = vunpack.c.0.s8 %v1431
    %v1433 = vlaneseq
    %v1434 = vshrl.u32 %v1433, 7
    %v1435 = vsub.s32 %v1432, %v1434
    %v1436 = vrot.slane %v1422, %v1435
    %v1437 = vcombine.high %v1429, %v1429
    %v1438 = vcombine.high %v1436, %v1436
    %v1439 = vcombine.high %v1415, %v1415
    %v1441 = vunpack.c.l.s4 1983009808
    %v1442 = vunpack.c.0.s8 %v1441
    %v1443 = vlaneseq
    %v1444 = vshrl.u32 %v1443, 7
    %v1445 = vsub.s32 %v1442, %v1444
    %v1446 = vrot.slane %v1415, %v1445
    %v1448 = vunpack.c.l.s4 1983009808
    %v1449 = vunpack.c.0.s8 %v1448
    %v1450 = vlaneseq
    %v1451 = vshrl.u32 %v1450, 7
    %v1452 = vsub.s32 %v1449, %v1451
    %v1453 = vrot.slane %v1439, %v1452
    %v1454 = vcombine.high %v1446, %v1446
    %v1455 = vcombine.high %v1453, %v1453
    %v1456 = vcombine.high %v1416, %v1416
    %v1458 = vunpack.c.l.s4 1983009808
    %v1459 = vunpack.c.0.s8 %v1458
    %v1460 = vlaneseq
    %v1461 = vshrl.u32 %v1460, 7
    %v1462 = vsub.s32 %v1459, %v1461
    %v1463 = vrot.slane %v1416, %v1462
    %v1465 = vunpack.c.l.s4 1983009808
    %v1466 = vunpack.c.0.s8 %v1465
    %v1467 = vlaneseq
    %v1468 = vshrl.u32 %v1467, 7
    %v1469 = vsub.s32 %v1466, %v1468
    %v1470 = vrot.slane %v1456, %v1469
    %v1471 = vcombine.high %v1463, %v1463
    %v1472 = vcombine.high %v1470, %v1470
    %v1473 = vcombine.high %v1417, %v1417
    %v1475 = vunpack.c.l.s4 1983009808
    %v1476 = vunpack.c.0.s8 %v1475
    %v1477 = vlaneseq
    %v1478 = vshrl.u32 %v1477, 7
    %v1479 = vsub.s32 %v1476, %v1478
    %v1480 = vrot.slane %v1417, %v1479
    %v1482 = vunpack.c.l.s4 1983009808
    %v1483 = vunpack.c.0.s8 %v1482
    %v1484 = vlaneseq
    %v1485 = vshrl.u32 %v1484, 7
    %v1486 = vsub.s32 %v1483, %v1485
    %v1487 = vrot.slane %v1473, %v1486
    %v1488 = vcombine.high %v1480, %v1480
    %v1489 = vcombine.high %v1487, %v1487
    %vm1506 = vcmask 123904
    %v1507 = vsel %vm1506, %v1429, -inf
    %v1508 = vrot.slane %v1507, 4
    %v1509 = vmax.f32 %v1507, %v1508
    %v1510 = vrot.slane %v1509, 2
    %v1511 = vmax.f32 %v1509, %v1510
    %v1512 = vrot.slane %v1511, 1
    %v1513 = vmax.f32 %v1511, %v1512
    %v1514 = vsel %vm1506, %v1437, -inf
    %v1515 = vrot.slane %v1514, 4
    %v1516 = vmax.f32 %v1514, %v1515
    %v1517 = vrot.slane %v1516, 2
    %v1518 = vmax.f32 %v1516, %v1517
    %v1519 = vrot.slane %v1518, 1
    %v1520 = vmax.f32 %v1518, %v1519
    %v1521 = vsel %vm1506, %v1436, -inf
    %v1522 = vrot.slane %v1521, 4
    %v1523 = vmax.f32 %v1521, %v1522
    %v1524 = vrot.slane %v1523, 2
    %v1525 = vmax.f32 %v1523, %v1524
    %v1526 = vrot.slane %v1525, 1
    %v1527 = vmax.f32 %v1525, %v1526
    %v1528 = vsel %vm1506, %v1438, -inf
    %v1529 = vrot.slane %v1528, 4
    %v1530 = vmax.f32 %v1528, %v1529
    %v1531 = vrot.slane %v1530, 2
    %v1532 = vmax.f32 %v1530, %v1531
    %v1533 = vrot.slane %v1532, 1
    %v1534 = vmax.f32 %v1532, %v1533
    %v1535 = vsel %vm1506, %v1446, -inf
    %v1536 = vrot.slane %v1535, 4
    %v1537 = vmax.f32 %v1535, %v1536
    %v1538 = vrot.slane %v1537, 2
    %v1539 = vmax.f32 %v1537, %v1538
    %v1540 = vrot.slane %v1539, 1
    %v1541 = vmax.f32 %v1539, %v1540
    %v1542 = vsel %vm1506, %v1454, -inf
    %v1543 = vrot.slane %v1542, 4
    %v1544 = vmax.f32 %v1542, %v1543
    %v1545 = vrot.slane %v1544, 2
    %v1546 = vmax.f32 %v1544, %v1545
    %v1547 = vrot.slane %v1546, 1
    %v1548 = vmax.f32 %v1546, %v1547
    %v1549 = vsel %vm1506, %v1453, -inf
    %v1550 = vrot.slane %v1549, 4
    %v1551 = vmax.f32 %v1549, %v1550
    %v1552 = vrot.slane %v1551, 2
    %v1553 = vmax.f32 %v1551, %v1552
    %v1554 = vrot.slane %v1553, 1
    %v1555 = vmax.f32 %v1553, %v1554
    %v1556 = vsel %vm1506, %v1455, -inf
    %v1557 = vrot.slane %v1556, 4
    %v1558 = vmax.f32 %v1556, %v1557
    %v1559 = vrot.slane %v1558, 2
    %v1560 = vmax.f32 %v1558, %v1559
    %v1561 = vrot.slane %v1560, 1
    %v1562 = vmax.f32 %v1560, %v1561
    %v1563 = vsel %vm1506, %v1463, -inf
    %v1564 = vrot.slane %v1563, 4
    %v1565 = vmax.f32 %v1563, %v1564
    %v1566 = vrot.slane %v1565, 2
    %v1567 = vmax.f32 %v1565, %v1566
    %v1568 = vrot.slane %v1567, 1
    %v1569 = vmax.f32 %v1567, %v1568
    %v1570 = vsel %vm1506, %v1471, -inf
    %v1571 = vrot.slane %v1570, 4
    %v1572 = vmax.f32 %v1570, %v1571
    %v1573 = vrot.slane %v1572, 2
    %v1574 = vmax.f32 %v1572, %v1573
    %v1575 = vrot.slane %v1574, 1
    %v1576 = vmax.f32 %v1574, %v1575
    %v1577 = vsel %vm1506, %v1470, -inf
    %v1578 = vrot.slane %v1577, 4
    %v1579 = vmax.f32 %v1577, %v1578
    %v1580 = vrot.slane %v1579, 2
    %v1581 = vmax.f32 %v1579, %v1580
    %v1582 = vrot.slane %v1581, 1
    %v1583 = vmax.f32 %v1581, %v1582
    %v1584 = vsel %vm1506, %v1472, -inf
    %v1585 = vrot.slane %v1584, 4
    %v1586 = vmax.f32 %v1584, %v1585
    %v1587 = vrot.slane %v1586, 2
    %v1588 = vmax.f32 %v1586, %v1587
    %v1589 = vrot.slane %v1588, 1
    %v1590 = vmax.f32 %v1588, %v1589
    %v1591 = vsel %vm1506, %v1480, -inf
    %v1592 = vrot.slane %v1591, 4
    %v1593 = vmax.f32 %v1591, %v1592
    %v1594 = vrot.slane %v1593, 2
    %v1595 = vmax.f32 %v1593, %v1594
    %v1596 = vrot.slane %v1595, 1
    %v1597 = vmax.f32 %v1595, %v1596
    %v1598 = vsel %vm1506, %v1488, -inf
    %v1599 = vrot.slane %v1598, 4
    %v1600 = vmax.f32 %v1598, %v1599
    %v1601 = vrot.slane %v1600, 2
    %v1602 = vmax.f32 %v1600, %v1601
    %v1603 = vrot.slane %v1602, 1
    %v1604 = vmax.f32 %v1602, %v1603
    %v1605 = vsel %vm1506, %v1487, -inf
    %v1606 = vrot.slane %v1605, 4
    %v1607 = vmax.f32 %v1605, %v1606
    %v1608 = vrot.slane %v1607, 2
    %v1609 = vmax.f32 %v1607, %v1608
    %v1610 = vrot.slane %v1609, 1
    %v1611 = vmax.f32 %v1609, %v1610
    %v1612 = vsel %vm1506, %v1489, -inf
    %v1613 = vrot.slane %v1612, 4
    %v1614 = vmax.f32 %v1612, %v1613
    %v1615 = vrot.slane %v1614, 2
    %v1616 = vmax.f32 %v1614, %v1615
    %v1617 = vrot.slane %v1616, 1
    %v1618 = vmax.f32 %v1616, %v1617
    %vm1623 = vcmask 1041409
    %v1624 = vsel %vm1623, %v1520, %v1513
    %vm1625 = vcmask 1042434
    %v1626 = vsel %vm1625, %v1527, %v1624
    %vm1627 = vcmask 1043459
    %v1628 = vsel %vm1627, %v1534, %v1626
    %vm1634 = vcmask 1045509
    %v1635 = vsel %vm1634, %v1576, %v1569
    %vm1636 = vcmask 1046534
    %v1637 = vsel %vm1636, %v1583, %v1635
    %vm1638 = vcmask 1047559
    %v1639 = vsel %vm1638, %v1590, %v1637
    %vm1641 = vcmask 1043456
    %v1642 = vsel %vm1641, %v1628, %v1639
    %v1644 = vsel %vm1623, %v1527, %v1520
    %v1645 = vsel %vm1625, %v1534, %v1644
    %v1646 = vsel %vm1627, %v1541, %v1645
    %v1649 = vsel %vm1634, %v1583, %v1576
    %v1650 = vsel %vm1636, %v1590, %v1649
    %v1651 = vsel %vm1638, %v1597, %v1650
    %v1653 = vsel %vm1641, %v1646, %v1651
    %v1655 = vsel %vm1623, %v1534, %v1527
    %v1656 = vsel %vm1625, %v1541, %v1655
    %v1657 = vsel %vm1627, %v1548, %v1656
    %v1660 = vsel %vm1634, %v1590, %v1583
    %v1661 = vsel %vm1636, %v1597, %v1660
    %v1662 = vsel %vm1638, %v1604, %v1661
    %v1664 = vsel %vm1641, %v1657, %v1662
    %v1666 = vsel %vm1623, %v1541, %v1534
    %v1667 = vsel %vm1625, %v1548, %v1666
    %v1668 = vsel %vm1627, %v1555, %v1667
    %v1671 = vsel %vm1634, %v1597, %v1590
    %v1672 = vsel %vm1636, %v1604, %v1671
    %v1673 = vsel %vm1638, %v1611, %v1672
    %v1675 = vsel %vm1641, %v1668, %v1673
    %v1677 = vsel %vm1623, %v1548, %v1541
    %v1678 = vsel %vm1625, %v1555, %v1677
    %v1679 = vsel %vm1627, %v1562, %v1678
    %v1682 = vsel %vm1634, %v1604, %v1597
    %v1683 = vsel %vm1636, %v1611, %v1682
    %v1684 = vsel %vm1638, %v1618, %v1683
    %v1686 = vsel %vm1641, %v1679, %v1684
    %1688 = vrot.lane.b32.xlu0 %v1653, 16
    %v1689 = vpop.permute.xlu0 %1688
    %1692 = vrot.lane.b32.xlu0 %v1664, 32
    %v1693 = vpop.permute.xlu0 %1692
    %1696 = vrot.lane.b32.xlu0 %v1675, 48
    %v1697 = vpop.permute.xlu0 %1696
    %1700 = vrot.lane.b32.xlu0 %v1686, 64
    %v1701 = vpop.permute.xlu0 %1700
    %vm1703 = vcmask 130048
    %v1704 = vsel %vm1703, %v1642, %v1689
    %v1705 = vsel %vm70, %v1704, %v1693
    %vm1706 = vcmask 392192
    %v1707 = vsel %vm1706, %v1705, %v1697
    %v1708 = vsel %vm439, %v1707, %v1701
    %v1709 = vld [vmem:[%s12] sm:$0xff]
    %v1710 = vld [vmem:[%s12 + $0x8] sm:$0xff]
    %v1711 = vld [vmem:[%s12 + $0x10] sm:$0xff]
    %v1712 = vld [vmem:[%s12 + $0x18] sm:$0xff]
    %v1713 = vld [vmem:[%s12 + $0x20] sm:$0xff]
    %v1714 = vld [vmem:[%s12 + $0x28] sm:$0xff]
    %v1715 = vld [vmem:[%s12 + $0x30] sm:$0xff]
    %v1716 = vld [vmem:[%s12 + $0x38] sm:$0xff]
    %v1717 = vld [vmem:[%s12 + $0x40] sm:$0xff]
    %v1718 = vld [vmem:[%s12 + $0x48] sm:$0xff]
    %v1719 = vld [vmem:[%s13] sm:$0x1]
    %v1721 = vlaneseq
    %v1722 = vshrl.u32 %v1721, 7
    %v1723 = vsub.s32 0, %v1722
    %v1724 = vrot.slane %v1719, %v1723
    %vm1726 = vcmask 654336
    %v1728 = vsel %vm1726, %v1708, 0
    %1730 = vmatprep.subr.mxu0 0.0
    %1731 = vmatpush1.msra.mxu0 %v1709
    %1732 = vmatprep.subr.mxu0 0.0
    %1733 = vmatpush1.msra.mxu0 %v1710
    %1734 = vmatprep.subr.mxu0 0.0
    %1735 = vmatpush1.msra.mxu0 %v1711
    %1736 = vmatprep.subr.mxu0 0.0
    %1737 = vmatpush1.msra.mxu0 %v1712
    %1738 = vmatprep.subr.mxu0 0.0
    %1739 = vmatpush1.msra.mxu0 %v1713
    %1740 = vmatprep.subr.mxu0 0.0
    %1741 = vmatpush1.msra.mxu0 %v1714
    %1742 = vmatprep.subr.mxu0 0.0
    %1743 = vmatpush1.msra.mxu0 %v1715
    %1744 = vmatprep.subr.mxu0 0.0
    %1745 = vmatpush1.msra.mxu0 %v1716
    %1746 = vmatprep.subr.mxu0 0.0
    %1747 = vmatpush1.msra.mxu0 %v1717
    %1748 = vmatprep.subr.mxu0 0.0
    %1749 = vmatpush1.msra.mxu0 %v1718
    %1750 = vmatprep.subr.mxu0 0.0
    %1751 = vmatpush1.msra.mxu0 0.0
    %1752 = vmatprep.subr.mxu0 0.0
    %1753 = vmatpush1.msra.mxu0 0.0
    %1754 = vmatprep.subr.mxu0 0.0
    %1755 = vmatpush1.msra.mxu0 0.0
    %1756 = vmatprep.subr.mxu0 0.0
    %1757 = vmatpush1.msra.mxu0 0.0
    %1758 = vmatprep.subr.mxu0 0.0
    %1759 = vmatpush1.msra.mxu0 0.0
    %1760 = vmatprep.subr.mxu0 0.0
    %1761 = vmatpush1.msra.mxu0 0.0
    %1762 = vmatprep.subr.mxu0 0.0
    %1763 = vmatpush1.msra.mxu0 0.0
    %1764 = vmatprep.subr.mxu0 0.0
    %1765 = vmatpush1.msra.mxu0 0.0
    %1766 = vmatprep.subr.mxu0 0.0
    %1767 = vmatpush1.msra.mxu0 0.0
    %1768 = vmatprep.subr.mxu0 0.0
    %1769 = vmatpush1.msra.mxu0 0.0
    %1770 = vmatprep.subr.mxu0 0.0
    %1771 = vmatpush1.msra.mxu0 0.0
    %1772 = vmatprep.subr.mxu0 0.0
    %1773 = vmatpush1.msra.mxu0 0.0
    %1774 = vmatprep.subr.mxu0 0.0
    %1775 = vmatpush1.msra.mxu0 0.0
    %1776 = vmatprep.subr.mxu0 0.0
    %1777 = vmatpush1.msra.mxu0 0.0
    %1778 = vmatprep.subr.mxu0 0.0
    %1779 = vmatpush1.msra.mxu0 0.0
    %1780 = vmatprep.subr.mxu0 0.0
    %1781 = vmatpush1.msra.mxu0 0.0
    %1782 = vmatprep.subr.mxu0 0.0
    %1783 = vmatpush1.msra.mxu0 0.0
    %1784 = vmatprep.subr.mxu0 0.0
    %1785 = vmatpush1.msra.mxu0 0.0
    %1786 = vmatprep.subr.mxu0 0.0
    %1787 = vmatpush1.msra.mxu0 0.0
    %1788 = vmatprep.subr.mxu0 0.0
    %1789 = vmatpush1.msra.mxu0 0.0
    %1790 = vmatprep.subr.mxu0 0.0
    %1791 = vmatpush1.msra.mxu0 0.0
    %1792 = vmatprep.subr.mxu0 0.0
    %1793 = vmatpush1.msra.mxu0 0.0
    %1794 = vmatprep.mubr.f32.mxu0 0.0
    %1795 = vmatmul.mubr.f32.gmra.mrb[0].mxu0 %v1728
    %v1796 = vpop.f32.mrb[0].mxu0
    %v1797 = vadd.f32 %v1724, %v1796
    %v1798 = vpop.f32.mrb[0].mxu0
    %1799 = vdwg.mxu0
    %vm1800 = vcmp.gt.f32.partialorder %v1797, 0.0
    %v1801 = vmin.f32 %v1797, 0.0
    %v1802 = vmul.f32 %v1801, 1.442695
    %v1803 = vpow.pop %v1802
    %v1804 = vsub.f32 %v1803, 1.0
    %v1805 = vsel %vm1800, %v1797, %v1804
    %v1807 = vrot.slane %v1805, 1
    %1808 = vrot.lane.b32.xlu0 %v1807, 32
    %v1809 = vpop.permute.xlu0 %1808
    %v1811 = vrot.slane %v1805, 2
    %1812 = vrot.lane.b32.xlu0 %v1811, 64
    %v1813 = vpop.permute.xlu0 %1812
    %v1815 = vrot.slane %v1805, 3
    %1816 = vrot.lane.b32.xlu0 %v1815, 96
    %v1817 = vpop.permute.xlu0 %1816
    %v1819 = vsel %vm70, %v1805, %v1809
    %v1820 = vsel %vm439, %v1819, %v1813
    %vm1821 = vcmask 785408
    %v1822 = vsel %vm1821, %v1820, %v1817
    %v1824 = vrot.slane %v1822, 3
    %vm1826 = vcmask 1040384
    %v1827 = vsel %vm1826, %v1822, %v1824
    %v1828 = vld [vmem:[%s14] sm:$0xff]
    %v1829 = vld [vmem:[%s14 + $0x8] sm:$0xff]
    %v1830 = vld [vmem:[%s14 + $0x10] sm:$0xff]
    %v1831 = vld [vmem:[%s14 + $0x18] sm:$0xff]
    %v1832 = vld [vmem:[%s14 + $0x20] sm:$0xff]
    %v1833 = vld [vmem:[%s14 + $0x28] sm:$0xff]
    %v1834 = vld [vmem:[%s14 + $0x30] sm:$0xff]
    %v1835 = vld [vmem:[%s14 + $0x38] sm:$0xff]
    %v1836 = vld [vmem:[%s14 + $0x40] sm:$0xff]
    %v1837 = vld [vmem:[%s14 + $0x48] sm:$0xff]
    %v1838 = vld [vmem:[%s14 + $0x50] sm:$0xff]
    %v1839 = vld [vmem:[%s14 + $0x58] sm:$0xff]
    %v1840 = vld [vmem:[%s14 + $0x60] sm:$0xff]
    %v1841 = vld [vmem:[%s14 + $0x68] sm:$0xff]
    %v1842 = vld [vmem:[%s14 + $0x70] sm:$0xff]
    %v1843 = vld [vmem:[%s14 + $0x78] sm:$0xff]
    %v1844 = vld [vmem:[%s15] sm:$0x1]
    %v1846 = vlaneseq
    %v1847 = vshrl.u32 %v1846, 7
    %v1848 = vsub.s32 0, %v1847
    %v1849 = vrot.slane %v1844, %v1848
    %1851 = vmatprep.subr.mxu0 0.0
    %1852 = vmatpush1.msra.mxu0 %v1828
    %1853 = vmatprep.subr.mxu0 0.0
    %1854 = vmatpush1.msra.mxu0 %v1829
    %1855 = vmatprep.subr.mxu0 0.0
    %1856 = vmatpush1.msra.mxu0 %v1830
    %1857 = vmatprep.subr.mxu0 0.0
    %1858 = vmatpush1.msra.mxu0 %v1831
    %1859 = vmatprep.subr.mxu0 0.0
    %1860 = vmatpush1.msra.mxu0 %v1832
    %1861 = vmatprep.subr.mxu0 0.0
    %1862 = vmatpush1.msra.mxu0 %v1833
    %1863 = vmatprep.subr.mxu0 0.0
    %1864 = vmatpush1.msra.mxu0 %v1834
    %1865 = vmatprep.subr.mxu0 0.0
    %1866 = vmatpush1.msra.mxu0 %v1835
    %1867 = vmatprep.subr.mxu0 0.0
    %1868 = vmatpush1.msra.mxu0 %v1836
    %1869 = vmatprep.subr.mxu0 0.0
    %1870 = vmatpush1.msra.mxu0 %v1837
    %1871 = vmatprep.subr.mxu0 0.0
    %1872 = vmatpush1.msra.mxu0 %v1838
    %1873 = vmatprep.subr.mxu0 0.0
    %1874 = vmatpush1.msra.mxu0 %v1839
    %1875 = vmatprep.subr.mxu0 0.0
    %1876 = vmatpush1.msra.mxu0 %v1840
    %1877 = vmatprep.subr.mxu0 0.0
    %1878 = vmatpush1.msra.mxu0 %v1841
    %1879 = vmatprep.subr.mxu0 0.0
    %1880 = vmatpush1.msra.mxu0 %v1842
    %1881 = vmatprep.subr.mxu0 0.0
    %1882 = vmatpush1.msra.mxu0 %v1843
    %1883 = vmatprep.subr.mxu0 0.0
    %1884 = vmatpush1.msra.mxu0 0.0
    %1885 = vmatprep.subr.mxu0 0.0
    %1886 = vmatpush1.msra.mxu0 0.0
    %1887 = vmatprep.subr.mxu0 0.0
    %1888 = vmatpush1.msra.mxu0 0.0
    %1889 = vmatprep.subr.mxu0 0.0
    %1890 = vmatpush1.msra.mxu0 0.0
    %1891 = vmatprep.subr.mxu0 0.0
    %1892 = vmatpush1.msra.mxu0 0.0
    %1893 = vmatprep.subr.mxu0 0.0
    %1894 = vmatpush1.msra.mxu0 0.0
    %1895 = vmatprep.subr.mxu0 0.0
    %1896 = vmatpush1.msra.mxu0 0.0
    %1897 = vmatprep.subr.mxu0 0.0
    %1898 = vmatpush1.msra.mxu0 0.0
    %1899 = vmatprep.subr.mxu0 0.0
    %1900 = vmatpush1.msra.mxu0 0.0
    %1901 = vmatprep.subr.mxu0 0.0
    %1902 = vmatpush1.msra.mxu0 0.0
    %1903 = vmatprep.subr.mxu0 0.0
    %1904 = vmatpush1.msra.mxu0 0.0
    %1905 = vmatprep.subr.mxu0 0.0
    %1906 = vmatpush1.msra.mxu0 0.0
    %1907 = vmatprep.subr.mxu0 0.0
    %1908 = vmatpush1.msra.mxu0 0.0
    %1909 = vmatprep.subr.mxu0 0.0
    %1910 = vmatpush1.msra.mxu0 0.0
    %1911 = vmatprep.subr.mxu0 0.0
    %1912 = vmatpush1.msra.mxu0 0.0
    %1913 = vmatprep.subr.mxu0 0.0
    %1914 = vmatpush1.msra.mxu0 0.0
    %1915 = vmatprep.mubr.f32.mxu0 0.0
    %1916 = vmatmul.mubr.f32.gmra.mrb[0].mxu0 %v1827
    %v1917 = vpop.f32.mrb[0].mxu0
    %v1918 = vadd.f32 %v1849, %v1917
    %v1919 = vpop.f32.mrb[0].mxu0
    %1920 = vdwg.mxu0
    %vm1921 = vcmp.gt.f32.partialorder %v1918, 0.0
    %v1922 = vmin.f32 %v1918, 0.0
    %v1923 = vmul.f32 %v1922, 1.442695
    %v1924 = vpow.pop %v1923
    %v1925 = vsub.f32 %v1924, 1.0
    %v1926 = vsel %vm1921, %v1918, %v1925
    %v1927 = vld [vmem:[%s16] sm:$0xff]
    %v1928 = vld [vmem:[%s16 + $0x8] sm:$0xff]
    %v1929 = vld [vmem:[%s16 + $0x10] sm:$0xff]
    %v1930 = vld [vmem:[%s16 + $0x18] sm:$0xff]
    %v1931 = vld [vmem:[%s16 + $0x20] sm:$0xff]
    %v1932 = vld [vmem:[%s16 + $0x28] sm:$0xff]
    %v1933 = vld [vmem:[%s16 + $0x30] sm:$0xff]
    %v1934 = vld [vmem:[%s16 + $0x38] sm:$0xff]
    %v1935 = vld [vmem:[%s16 + $0x40] sm:$0xff]
    %v1936 = vld [vmem:[%s16 + $0x48] sm:$0xff]
    %v1937 = vld [vmem:[%s16 + $0x50] sm:$0xff]
    %v1938 = vld [vmem:[%s16 + $0x58] sm:$0xff]
    %v1939 = vld [vmem:[%s16 + $0x60] sm:$0xff]
    %v1940 = vld [vmem:[%s16 + $0x68] sm:$0xff]
    %v1941 = vld [vmem:[%s16 + $0x70] sm:$0xff]
    %v1942 = vld [vmem:[%s16 + $0x78] sm:$0xff]
    %v1943 = vld [vmem:[%s17] sm:$0x1]
    %v1945 = vlaneseq
    %v1946 = vshrl.u32 %v1945, 7
    %v1947 = vsub.s32 0, %v1946
    %v1948 = vrot.slane %v1943, %v1947
    %1950 = vmatprep.subr.mxu0 0.0
    %1951 = vmatpush1.msra.mxu0 %v1927
    %1952 = vmatprep.subr.mxu0 0.0
    %1953 = vmatpush1.msra.mxu0 %v1928
    %1954 = vmatprep.subr.mxu0 0.0
    %1955 = vmatpush1.msra.mxu0 %v1929
    %1956 = vmatprep.subr.mxu0 0.0
    %1957 = vmatpush1.msra.mxu0 %v1930
    %1958 = vmatprep.subr.mxu0 0.0
    %1959 = vmatpush1.msra.mxu0 %v1931
    %1960 = vmatprep.subr.mxu0 0.0
    %1961 = vmatpush1.msra.mxu0 %v1932
    %1962 = vmatprep.subr.mxu0 0.0
    %1963 = vmatpush1.msra.mxu0 %v1933
    %1964 = vmatprep.subr.mxu0 0.0
    %1965 = vmatpush1.msra.mxu0 %v1934
    %1966 = vmatprep.subr.mxu0 0.0
    %1967 = vmatpush1.msra.mxu0 %v1935
    %1968 = vmatprep.subr.mxu0 0.0
    %1969 = vmatpush1.msra.mxu0 %v1936
    %1970 = vmatprep.subr.mxu0 0.0
    %1971 = vmatpush1.msra.mxu0 %v1937
    %1972 = vmatprep.subr.mxu0 0.0
    %1973 = vmatpush1.msra.mxu0 %v1938
    %1974 = vmatprep.subr.mxu0 0.0
    %1975 = vmatpush1.msra.mxu0 %v1939
    %1976 = vmatprep.subr.mxu0 0.0
    %1977 = vmatpush1.msra.mxu0 %v1940
    %1978 = vmatprep.subr.mxu0 0.0
    %1979 = vmatpush1.msra.mxu0 %v1941
    %1980 = vmatprep.subr.mxu0 0.0
    %1981 = vmatpush1.msra.mxu0 %v1942
    %1982 = vmatprep.subr.mxu0 0.0
    %1983 = vmatpush1.msra.mxu0 0.0
    %1984 = vmatprep.subr.mxu0 0.0
    %1985 = vmatpush1.msra.mxu0 0.0
    %1986 = vmatprep.subr.mxu0 0.0
    %1987 = vmatpush1.msra.mxu0 0.0
    %1988 = vmatprep.subr.mxu0 0.0
    %1989 = vmatpush1.msra.mxu0 0.0
    %1990 = vmatprep.subr.mxu0 0.0
    %1991 = vmatpush1.msra.mxu0 0.0
    %1992 = vmatprep.subr.mxu0 0.0
    %1993 = vmatpush1.msra.mxu0 0.0
    %1994 = vmatprep.subr.mxu0 0.0
    %1995 = vmatpush1.msra.mxu0 0.0
    %1996 = vmatprep.subr.mxu0 0.0
    %1997 = vmatpush1.msra.mxu0 0.0
    %1998 = vmatprep.subr.mxu0 0.0
    %1999 = vmatpush1.msra.mxu0 0.0
    %2000 = vmatprep.subr.mxu0 0.0
    %2001 = vmatpush1.msra.mxu0 0.0
    %2002 = vmatprep.subr.mxu0 0.0
    %2003 = vmatpush1.msra.mxu0 0.0
    %2004 = vmatprep.subr.mxu0 0.0
    %2005 = vmatpush1.msra.mxu0 0.0
    %2006 = vmatprep.subr.mxu0 0.0
    %2007 = vmatpush1.msra.mxu0 0.0
    %2008 = vmatprep.subr.mxu0 0.0
    %2009 = vmatpush1.msra.mxu0 0.0
    %2010 = vmatprep.subr.mxu0 0.0
    %2011 = vmatpush1.msra.mxu0 0.0
    %2012 = vmatprep.subr.mxu0 0.0
    %2013 = vmatpush1.msra.mxu0 0.0
    %2014 = vmatprep.mubr.f32.mxu0 0.0
    %2015 = vmatmul.mubr.f32.gmra.mrb[0].mxu0 %v1926
    %v2016 = vpop.f32.mrb[0].mxu0
    %v2017 = vadd.f32 %v1948, %v2016
    %v2018 = vpop.f32.mrb[0].mxu0
    %2019 = vdwg.mxu0
    %2020 = vst [vmem:[#allocation3] sm:$0x3] %v2017
    // Predicated region
    $region74: #{forward.1} parent=1 // pred_check
      _
    $region75: #{forward.1} parent=1 // pred_check_branch
      %2022 = sbr.rel (0) target = $region77
    $region76: #{forward.1} parent=1 // pred_region
      %s2024 = ssub.s32 32, 32
      %2025 = vsyncadd [#allocation4], %s2024
      %s2027 = sshll.u32 [#allocation3], 4
      %s2028 = int_to_ptr.vmem [resolvable:$true] %s2027
      %2030 = dma.vmem_to_hbm [thread:$0]  %s2028, 32, %s18, [#allocation4]
    $region77: #{forward.1} parent=1 // pred_fallthru
      _
    // Predicated region
    $region78: #{forward.1} parent=1 // pred_check
      _
    $region79: #{forward.1} parent=1 // pred_check_branch
      %2032 = sbr.rel (0) target = $region81
    $region80: #{forward.1} parent=1 // pred_region
      %2033 = dma.done [#allocation4], 32
    $region81: #{forward.1} parent=1 // pred_fallthru
      _
    %2034 = vsyncpa [#allocation4], 1

</llo_original>
